<compile_context>
chip_gen: v7x
topology: tpu7x:2x2x1
jax: 0.10.0
libtpu: 0.0.40
codegen_flags: <defaults>
</compile_context>

<pallas_src>
import functools
import math

import jax
import jax.numpy as jnp
from jax.experimental import pallas as pl
from jax.experimental.pallas import tpu as pltpu


def _mhsa_flash_kernel(q_ref, k_ref, v_ref, x_ref,
                       wo_ref, bo_ref, lnw_ref, lnb_ref,
                       o_ref,
                       m_scr, l_scr, acc_scr,
                       *, num_heads, head_dim, ln_eps):
    """One grid step = (one batch element, one Q tile, one KV tile).

    q_ref   : (1, Tq, E)   bf16 pre-projected queries (scale folded in)
    k_ref   : (1, Tkv, E)  bf16 pre-projected keys
    v_ref   : (1, Tkv, E)  bf16 pre-projected values
    x_ref   : (1, Tq, E)   f32 residual input rows of x
    wo_ref  : (E, E)       bf16 out_proj.weight^T (lane-dense)
    bo/lnw/lnb : (1, E)    f32 out_proj bias / LayerNorm weight / LayerNorm bias
    o_ref   : (1, Tq, E)   output tile (written on the last KV step only)
    scratch : m_scr/l_scr (Tq, H) f32, acc_scr (Tq, E) f32 (heads on lanes)
    """
    H, D = num_heads, head_dim
    kv_idx = pl.program_id(2)
    num_kv = pl.num_programs(2)

    @pl.when(kv_idx == 0)
    def _init():
        m_scr[...] = jnp.full_like(m_scr, -jnp.inf)
        l_scr[...] = jnp.zeros_like(l_scr)
        acc_scr[...] = jnp.zeros_like(acc_scr)

    q = q_ref[0]          # (Tq, E)  bf16
    k = k_ref[0]          # (Tkv, E) bf16
    v = v_ref[0]          # (Tkv, E) bf16

    # Online-softmax update with this KV tile, head by head (heads are static
    # lane slices; no XLU head transposes anywhere).
    # TODO(synk): for H >= 16 switch to lax.fori_loop(..., unroll=True) with
    # pl.ds head slices to bound code size / vreg pressure.
    for h in range(H):
        sl = slice(h * D, (h + 1) * D)
        s = jnp.dot(q[:, sl], k[:, sl].T,
                    preferred_element_type=jnp.float32)             # (Tq, Tkv)
        m_prev = m_scr[:, h:h + 1]                                   # (Tq, 1)
        m_new = jnp.maximum(m_prev, jnp.max(s, axis=-1, keepdims=True))
        alpha = jnp.exp(m_prev - m_new)
        p = jnp.exp(s - m_new)
        l_scr[:, h:h + 1] = (alpha * l_scr[:, h:h + 1]
                             + jnp.sum(p, axis=-1, keepdims=True))
        acc_scr[:, sl] = alpha * acc_scr[:, sl] + jnp.dot(
            p.astype(jnp.bfloat16), v[:, sl],
            preferred_element_type=jnp.float32)
        m_scr[:, h:h + 1] = m_new

    # ---- finalize: normalize, single out-proj matmul, residual, LayerNorm ----
    @pl.when(kv_idx == num_kv - 1)
    def _finalize():
        # Exact reciprocal (runs once per Q tile -> essentially free) for
        # closer PyTorch parity.
        for h in range(H):
            sl = slice(h * D, (h + 1) * D)
            acc_scr[:, sl] = acc_scr[:, sl] * pl.reciprocal(
                l_scr[:, h:h + 1], approx=False)
        attn = acc_scr[...].astype(jnp.bfloat16)                     # (Tq, E)
        # Heads are already concatenated along lanes -> one lane-dense matmul.
        y = (x_ref[0] + bo_ref[...] +
             jnp.dot(attn, wo_ref[...], preferred_element_type=jnp.float32))
        mean = jnp.mean(y, axis=-1, keepdims=True)
        cent = y - mean
        var = jnp.mean(cent * cent, axis=-1, keepdims=True)
        y = cent * jax.lax.rsqrt(var + ln_eps)
        y = y * lnw_ref[...] + lnb_ref[...]
        o_ref[0] = y.astype(o_ref.dtype)


def _tpu_generation_defaults():
    """(block_q, block_kv, vmem_limit_bytes) per TPU generation."""
    kind = ""
    try:
        kind = jax.devices()[0].device_kind.lower()
    except Exception:  # pragma: no cover - CPU / unknown backend fallback
        pass
    if "v5" in kind:
        # v5e: 128x128 MXU is already filled at Tkv=128; 128 MiB VMEM; low HBM
        # BW -> bigger Q tiles hide the repeated K/V stream.
        return 256, 128, 100 * 1024 * 1024
    if "v6" in kind:
        # v6e: 256-wide MXU, 128 MiB VMEM -> 256 tiles, generous VMEM limit.
        return 256, 256, 100 * 1024 * 1024
    # v7x (or unknown): 256-wide MXU but only 64 MiB VMEM per TensorCore.
    return 256, 256, 48 * 1024 * 1024


def _resident_spec(block_shape):
    """BlockSpec for a constant-index (weight-like) input.

    The block is DMA'd once; when the installed JAX supports pipeline_mode we
    single-buffer it so it does not pay for a useless second VMEM buffer.
    """
    index_map = lambda *_: (0,) * len(block_shape)
    if hasattr(pl, "Buffered"):
        return pl.BlockSpec(block_shape, index_map, pipeline_mode=pl.Buffered(1))
    return pl.BlockSpec(block_shape, index_map)


def mhsa_forward(x, params, num_heads, *, block_q=None, block_kv=None,
                 compute_dtype=jnp.bfloat16, ln_eps=1e-5):
    B, S, E = x.shape
    assert E % num_heads == 0
    H = num_heads
    D = E // H
    scale = 1.0 / math.sqrt(D)

    dflt_q, dflt_kv, vmem_limit = _tpu_generation_defaults()
    block_q = min(S, dflt_q) if block_q is None else block_q
    block_kv = min(S, dflt_kv) if block_kv is None else block_kv
    assert S % block_q == 0 and S % block_kv == 0
    # TODO(synk): pad/mask the last tile to support S not divisible by the tile size.

    # ---- Q/K/V projection: ONE fused lane-dense XLA matmul (no per-Q-tile
    # recompute inside the kernel).  The softmax scale is folded into the Q
    # columns of the packed weight/bias so no extra elementwise pass is needed.
    w_in = params['in_proj_weight']                      # (3E, E)
    b_in = params['in_proj_bias']                        # (3E,)
    q_scale = jnp.concatenate([jnp.full((E,), scale, w_in.dtype),
                               jnp.ones((2 * E,), w_in.dtype)])
    w_packed = (w_in * q_scale[:, None]).T               # (E, 3E)
    b_packed = b_in * q_scale
    qkv = (jnp.dot(x, w_packed) + b_packed).astype(compute_dtype)   # (B, S, 3E)
    # Head h of q/k/v lives at lanes [h*D,(h+1)*D) -- exactly the layout the
    # kernel consumes, so there are no head transposes anywhere.
    q, k, v = qkv[..., :E], qkv[..., E:2 * E], qkv[..., 2 * E:]

    # TODO(synk): for very large E on v7x, chunk wo along its contraction dim
    # with an extra grid axis (and optionally store it in fp8) to bound weight
    # residency under the 64 MiB VMEM.
    wo = jnp.transpose(params['out_proj_weight'], (1, 0)).astype(compute_dtype)  # (E, E)
    bo = params['out_proj_bias'].reshape(1, E).astype(jnp.float32)
    lnw = params['ln_weight'].reshape(1, E).astype(jnp.float32)
    lnb = params['ln_bias'].reshape(1, E).astype(jnp.float32)

    grid = (B, S // block_q, S // block_kv)
    kernel = functools.partial(_mhsa_flash_kernel, num_heads=H, head_dim=D,
                               ln_eps=ln_eps)

    grid_spec = pltpu.PrefetchScalarGridSpec(
        num_scalar_prefetch=0,
        grid=grid,
        in_specs=[
            pl.BlockSpec((1, block_q, E), lambda b, qi, ki: (b, qi, 0)),   # q  (bf16)
            pl.BlockSpec((1, block_kv, E), lambda b, qi, ki: (b, ki, 0)),  # k  (bf16)
            pl.BlockSpec((1, block_kv, E), lambda b, qi, ki: (b, ki, 0)),  # v  (bf16)
            pl.BlockSpec((1, block_q, E), lambda b, qi, ki: (b, qi, 0)),   # x  (f32 residual)
            _resident_spec((E, E)),                                        # W_out^T
            _resident_spec((1, E)),                                        # out_proj bias
            _resident_spec((1, E)),                                        # LN weight
            _resident_spec((1, E)),                                        # LN bias
        ],
        out_specs=pl.BlockSpec((1, block_q, E), lambda b, qi, ki: (b, qi, 0)),
        scratch_shapes=[
            pltpu.VMEM((block_q, H), jnp.float32),   # running max per head
            pltpu.VMEM((block_q, H), jnp.float32),   # running sum per head
            pltpu.VMEM((block_q, E), jnp.float32),   # output accumulator (heads on lanes)
        ],
    )

    return pl.pallas_call(
        kernel,
        out_shape=jax.ShapeDtypeStruct((B, S, E), x.dtype),
        grid_spec=grid_spec,
        compiler_params=pltpu.CompilerParams(
            dimension_semantics=("parallel", "parallel", "arbitrary"),
            vmem_limit_bytes=vmem_limit,
        ),
    )(q, k, v, x, wo, bo, lnw, lnb)


def mhsa_reference(x, params, num_heads):
    """Pure-JAX f32 reference with identical semantics (correctness check)."""
    B, S, E = x.shape
    H = num_heads
    D = E // H
    scale = 1.0 / math.sqrt(D)

    qkv = jnp.einsum('bse,fe->bsf', x, params['in_proj_weight']) + params['in_proj_bias']
    q, k, v = qkv[..., :E], qkv[..., E:2 * E], qkv[..., 2 * E:]
    q = q.reshape(B, S, H, D).transpose(0, 2, 1, 3)
    k = k.reshape(B, S, H, D).transpose(0, 2, 1, 3)
    v = v.reshape(B, S, H, D).transpose(0, 2, 1, 3)
    scores = jnp.einsum('bhqd,bhkd->bhqk', q, k) * scale
    p = jax.nn.softmax(scores, axis=-1)
    attn = jnp.einsum('bhqk,bhkd->bhqd', p, v)
    attn = attn.transpose(0, 2, 1, 3).reshape(B, S, E)
    attn = jnp.einsum('bse,fe->bsf', attn, params['out_proj_weight']) + params['out_proj_bias']
    y = x + attn
    mean = jnp.mean(y, axis=-1, keepdims=True)
    var = jnp.mean((y - mean) ** 2, axis=-1, keepdims=True)
    y = (y - mean) * jax.lax.rsqrt(var + 1e-5)
    return y * params['ln_weight'] + params['ln_bias']


def init_params(key, embed_dim):
    k1, k2 = jax.random.split(key)
    return {
        # nn.MultiheadAttention parameter shapes
        'in_proj_weight': 0.02 * jax.random.normal(k1, (3 * embed_dim, embed_dim), jnp.float32),
        'in_proj_bias': jnp.zeros((3 * embed_dim,), jnp.float32),
        'out_proj_weight': 0.02 * jax.random.normal(k2, (embed_dim, embed_dim), jnp.float32),
        'out_proj_bias': jnp.zeros((embed_dim,), jnp.float32),
        # nn.LayerNorm default init
        'ln_weight': jnp.ones((embed_dim,), jnp.float32),
        'ln_bias': jnp.zeros((embed_dim,), jnp.float32),
    }


if __name__ == "__main__":
    batch, seq, embed_dim, num_heads = 2, 8, 32, 4

    key = jax.random.PRNGKey(0)
    kx, kp = jax.random.split(key)
    x = jax.random.normal(kx, (batch, seq, embed_dim), jnp.float32)
    params = init_params(kp, embed_dim)

    out = jax.block_until_ready(mhsa_forward(x, params, num_heads))
    ref = mhsa_reference(x, params, num_heads)

    assert out.shape == (batch, seq, embed_dim)
    # bf16 MXU operands (f32 accumulation) -> compare with a bf16-appropriate tolerance.
    assert jnp.max(jnp.abs(out - ref)) < 2e-2, "mismatch vs pure-JAX reference"

    print("KERNEL_OK")
</pallas_src>

<mosaic_0001>
module attributes {stable_mosaic.version = 11 : i64} {
  func.func @_mhsa_flash_kernel(%arg0: i32, %arg1: i32, %arg2: i32, %arg3: memref<1x8x32xbf16, #tpu.memory_space<vmem>>, %arg4: memref<1x8x32xbf16, #tpu.memory_space<vmem>>, %arg5: memref<1x8x32xbf16, #tpu.memory_space<vmem>>, %arg6: memref<1x8x32xf32, #tpu.memory_space<vmem>>, %arg7: memref<32x32xbf16, #tpu.memory_space<vmem>>, %arg8: memref<1x32xf32, #tpu.memory_space<vmem>>, %arg9: memref<1x32xf32, #tpu.memory_space<vmem>>, %arg10: memref<1x32xf32, #tpu.memory_space<vmem>>, %arg11: memref<1x8x32xf32, #tpu.memory_space<vmem>>, %arg12: memref<8x4xf32, #tpu.memory_space<vmem>>, %arg13: memref<8x4xf32, #tpu.memory_space<vmem>>, %arg14: memref<8x32xf32, #tpu.memory_space<vmem>>) attributes {dimension_semantics = [#tpu.dimension_semantics<parallel>, #tpu.dimension_semantics<parallel>, #tpu.dimension_semantics<arbitrary>], iteration_bounds = array<i64: 2, 1, 1>, scalar_prefetch = 0 : i64, scratch_operands = 3 : i64, tpu.core_type = #tpu.core_type<tc>, window_params = [{transform_indices = @transform_0, window_bounds = array<i64: 1, 8, 32>}, {transform_indices = @transform_1, window_bounds = array<i64: 1, 8, 32>}, {transform_indices = @transform_2, window_bounds = array<i64: 1, 8, 32>}, {transform_indices = @transform_3, window_bounds = array<i64: 1, 8, 32>}, {pipeline_mode = #tpu.pipeline_mode<synchronous>, transform_indices = @transform_4, window_bounds = array<i64: 32, 32>}, {pipeline_mode = #tpu.pipeline_mode<synchronous>, transform_indices = @transform_5, window_bounds = array<i64: 1, 32>}, {pipeline_mode = #tpu.pipeline_mode<synchronous>, transform_indices = @transform_6, window_bounds = array<i64: 1, 32>}, {pipeline_mode = #tpu.pipeline_mode<synchronous>, transform_indices = @transform_7, window_bounds = array<i64: 1, 32>}, {transform_indices = @transform_8, window_bounds = array<i64: 1, 8, 32>}]} {
    %c0_i32 = arith.constant 0 : i32
    %0 = arith.cmpi eq, %arg2, %c0_i32 : i32
    %1 = arith.extui %0 : i1 to i32
    %c0_i32_0 = arith.constant 0 : i32
    %2 = arith.cmpi ne, %1, %c0_i32_0 : i32
    scf.if %2 {
      %cst_68 = arith.constant 0xFF800000 : f32
      %124 = vector.broadcast %cst_68 : f32 to vector<8x4xf32>
      %c0_69 = arith.constant 0 : index
      %c0_70 = arith.constant 0 : index
      %125 = vector.load %arg12[%c0_69, %c0_70] : memref<8x4xf32, #tpu.memory_space<vmem>>, vector<8x4xf32>
      tpu.vector_store %arg12[%c0_69, %c0_70], %124 {strides = array<i32>} : memref<8x4xf32, #tpu.memory_space<vmem>>, vector<8x4xf32>,
      %cst_71 = arith.constant 0.000000e+00 : f32
      %126 = vector.broadcast %cst_71 : f32 to vector<8x4xf32>
      %c0_72 = arith.constant 0 : index
      %c0_73 = arith.constant 0 : index
      %127 = vector.load %arg13[%c0_72, %c0_73] : memref<8x4xf32, #tpu.memory_space<vmem>>, vector<8x4xf32>
      tpu.vector_store %arg13[%c0_72, %c0_73], %126 {strides = array<i32>} : memref<8x4xf32, #tpu.memory_space<vmem>>, vector<8x4xf32>,
      %cst_74 = arith.constant 0.000000e+00 : f32
      %128 = vector.broadcast %cst_74 : f32 to vector<8x32xf32>
      %c0_75 = arith.constant 0 : index
      %c0_76 = arith.constant 0 : index
      %129 = vector.load %arg14[%c0_75, %c0_76] : memref<8x32xf32, #tpu.memory_space<vmem>>, vector<8x32xf32>
      tpu.vector_store %arg14[%c0_75, %c0_76], %128 {strides = array<i32>} : memref<8x32xf32, #tpu.memory_space<vmem>>, vector<8x32xf32>,
    } else {
    }
    %c0 = arith.constant 0 : index
    %c0_1 = arith.constant 0 : index
    %c0_2 = arith.constant 0 : index
    %3 = vector.load %arg3[%c0, %c0_1, %c0_2] : memref<1x8x32xbf16, #tpu.memory_space<vmem>>, vector<1x8x32xbf16>
    %4 = vector.shape_cast %3 : vector<1x8x32xbf16> to vector<8x32xbf16>
    %c0_3 = arith.constant 0 : index
    %c0_4 = arith.constant 0 : index
    %c0_5 = arith.constant 0 : index
    %5 = vector.load %arg4[%c0_3, %c0_4, %c0_5] : memref<1x8x32xbf16, #tpu.memory_space<vmem>>, vector<1x8x32xbf16>
    %6 = vector.shape_cast %5 : vector<1x8x32xbf16> to vector<8x32xbf16>
    %c0_6 = arith.constant 0 : index
    %c0_7 = arith.constant 0 : index
    %c0_8 = arith.constant 0 : index
    %7 = vector.load %arg5[%c0_6, %c0_7, %c0_8] : memref<1x8x32xbf16, #tpu.memory_space<vmem>>, vector<1x8x32xbf16>
    %8 = vector.shape_cast %7 : vector<1x8x32xbf16> to vector<8x32xbf16>
    %9 = vector.extract_strided_slice %4 {offsets = [0, 0], sizes = [8, 8], strides = [1, 1]} : vector<8x32xbf16> to vector<8x8xbf16>
    %10 = vector.extract_strided_slice %6 {offsets = [0, 0], sizes = [8, 8], strides = [1, 1]} : vector<8x32xbf16> to vector<8x8xbf16>
    %11 = tpu.transpose %10, [1, 0] : vector<8x8xbf16> -> vector<8x8xbf16>
    %cst = arith.constant dense<0.000000e+00> : vector<8x8xf32>
    %12 = tpu.matmul %9, %11, %cst {dimension_numbers = #tpu.dot_dimension_numbers<[1], [0], [0], [1], [0, 0, 1, 1], [], []>} : vector<8x8xbf16>, vector<8x8xbf16>, vector<8x8xf32> -> vector<8x8xf32>
    %c0_9 = arith.constant 0 : index
    %c0_10 = arith.constant 0 : index
    %13 = vector.load %arg12[%c0_9, %c0_10] : memref<8x4xf32, #tpu.memory_space<vmem>>, vector<8x1xf32>
    %cst_11 = arith.constant dense<0xFF800000> : vector<8xf32>
    %14 = vector.multi_reduction <maximumf>, %12, %cst_11 [1] : vector<8x8xf32> to vector<8xf32>
    %15 = vector.shape_cast %14 : vector<8xf32> to vector<8x1xf32>
    %16 = arith.maximumf %13, %15 : vector<8x1xf32>
    %17 = arith.subf %13, %16 : vector<8x1xf32>
    %18 = math.exp %17 : vector<8x1xf32>
    %19 = vector.broadcast %16 : vector<8x1xf32> to vector<8x8xf32>
    %20 = arith.subf %12, %19 : vector<8x8xf32>
    %21 = math.exp %20 : vector<8x8xf32>
    %c0_12 = arith.constant 0 : index
    %c0_13 = arith.constant 0 : index
    %22 = vector.load %arg13[%c0_12, %c0_13] : memref<8x4xf32, #tpu.memory_space<vmem>>, vector<8x1xf32>
    %23 = arith.mulf %18, %22 : vector<8x1xf32>
    %cst_14 = arith.constant dense<0.000000e+00> : vector<8xf32>
    %24 = vector.multi_reduction <add>, %21, %cst_14 [1] : vector<8x8xf32> to vector<8xf32>
    %25 = vector.shape_cast %24 : vector<8xf32> to vector<8x1xf32>
    %26 = arith.addf %23, %25 : vector<8x1xf32>
    %c0_15 = arith.constant 0 : index
    %c0_16 = arith.constant 0 : index
    %27 = vector.load %arg13[%c0_15, %c0_16] : memref<8x4xf32, #tpu.memory_space<vmem>>, vector<8x1xf32>
    tpu.vector_store %arg13[%c0_15, %c0_16], %26 {strides = array<i32>} : memref<8x4xf32, #tpu.memory_space<vmem>>, vector<8x1xf32>,
    %c0_17 = arith.constant 0 : index
    %c0_18 = arith.constant 0 : index
    %28 = vector.load %arg14[%c0_17, %c0_18] : memref<8x32xf32, #tpu.memory_space<vmem>>, vector<8x8xf32>
    %29 = vector.broadcast %18 : vector<8x1xf32> to vector<8x8xf32>
    %30 = arith.mulf %29, %28 : vector<8x8xf32>
    %31 = arith.truncf %21 : vector<8x8xf32> to vector<8x8xbf16>
    %32 = vector.extract_strided_slice %8 {offsets = [0, 0], sizes = [8, 8], strides = [1, 1]} : vector<8x32xbf16> to vector<8x8xbf16>
    %cst_19 = arith.constant dense<0.000000e+00> : vector<8x8xf32>
    %33 = tpu.matmul %31, %32, %cst_19 {dimension_numbers = #tpu.dot_dimension_numbers<[1], [0], [0], [1], [0, 0, 1, 1], [], []>} : vector<8x8xbf16>, vector<8x8xbf16>, vector<8x8xf32> -> vector<8x8xf32>
    %34 = arith.addf %30, %33 : vector<8x8xf32>
    %c0_20 = arith.constant 0 : index
    %c0_21 = arith.constant 0 : index
    %35 = vector.load %arg14[%c0_20, %c0_21] : memref<8x32xf32, #tpu.memory_space<vmem>>, vector<8x8xf32>
    tpu.vector_store %arg14[%c0_20, %c0_21], %34 {strides = array<i32>} : memref<8x32xf32, #tpu.memory_space<vmem>>, vector<8x8xf32>,
    %c0_22 = arith.constant 0 : index
    %c0_23 = arith.constant 0 : index
    %36 = vector.load %arg12[%c0_22, %c0_23] : memref<8x4xf32, #tpu.memory_space<vmem>>, vector<8x1xf32>
    tpu.vector_store %arg12[%c0_22, %c0_23], %16 {strides = array<i32>} : memref<8x4xf32, #tpu.memory_space<vmem>>, vector<8x1xf32>,
    %37 = vector.extract_strided_slice %4 {offsets = [0, 8], sizes = [8, 8], strides = [1, 1]} : vector<8x32xbf16> to vector<8x8xbf16>
    %38 = vector.extract_strided_slice %6 {offsets = [0, 8], sizes = [8, 8], strides = [1, 1]} : vector<8x32xbf16> to vector<8x8xbf16>
    %39 = tpu.transpose %38, [1, 0] : vector<8x8xbf16> -> vector<8x8xbf16>
    %cst_24 = arith.constant dense<0.000000e+00> : vector<8x8xf32>
    %40 = tpu.matmul %37, %39, %cst_24 {dimension_numbers = #tpu.dot_dimension_numbers<[1], [0], [0], [1], [0, 0, 1, 1], [], []>} : vector<8x8xbf16>, vector<8x8xbf16>, vector<8x8xf32> -> vector<8x8xf32>
    %c0_25 = arith.constant 0 : index
    %c1 = arith.constant 1 : index
    %41 = vector.load %arg12[%c0_25, %c1] : memref<8x4xf32, #tpu.memory_space<vmem>>, vector<8x1xf32>
    %cst_26 = arith.constant dense<0xFF800000> : vector<8xf32>
    %42 = vector.multi_reduction <maximumf>, %40, %cst_26 [1] : vector<8x8xf32> to vector<8xf32>
    %43 = vector.shape_cast %42 : vector<8xf32> to vector<8x1xf32>
    %44 = arith.maximumf %41, %43 : vector<8x1xf32>
    %45 = arith.subf %41, %44 : vector<8x1xf32>
    %46 = math.exp %45 : vector<8x1xf32>
    %47 = vector.broadcast %44 : vector<8x1xf32> to vector<8x8xf32>
    %48 = arith.subf %40, %47 : vector<8x8xf32>
    %49 = math.exp %48 : vector<8x8xf32>
    %c0_27 = arith.constant 0 : index
    %c1_28 = arith.constant 1 : index
    %50 = vector.load %arg13[%c0_27, %c1_28] : memref<8x4xf32, #tpu.memory_space<vmem>>, vector<8x1xf32>
    %51 = arith.mulf %46, %50 : vector<8x1xf32>
    %cst_29 = arith.constant dense<0.000000e+00> : vector<8xf32>
    %52 = vector.multi_reduction <add>, %49, %cst_29 [1] : vector<8x8xf32> to vector<8xf32>
    %53 = vector.shape_cast %52 : vector<8xf32> to vector<8x1xf32>
    %54 = arith.addf %51, %53 : vector<8x1xf32>
    %c0_30 = arith.constant 0 : index
    %c1_31 = arith.constant 1 : index
    %55 = vector.load %arg13[%c0_30, %c1_31] : memref<8x4xf32, #tpu.memory_space<vmem>>, vector<8x1xf32>
    tpu.vector_store %arg13[%c0_30, %c1_31], %54 {strides = array<i32>} : memref<8x4xf32, #tpu.memory_space<vmem>>, vector<8x1xf32>,
    %c0_32 = arith.constant 0 : index
    %c8 = arith.constant 8 : index
    %56 = vector.load %arg14[%c0_32, %c8] : memref<8x32xf32, #tpu.memory_space<vmem>>, vector<8x8xf32>
    %57 = vector.broadcast %46 : vector<8x1xf32> to vector<8x8xf32>
    %58 = arith.mulf %57, %56 : vector<8x8xf32>
    %59 = arith.truncf %49 : vector<8x8xf32> to vector<8x8xbf16>
    %60 = vector.extract_strided_slice %8 {offsets = [0, 8], sizes = [8, 8], strides = [1, 1]} : vector<8x32xbf16> to vector<8x8xbf16>
    %cst_33 = arith.constant dense<0.000000e+00> : vector<8x8xf32>
    %61 = tpu.matmul %59, %60, %cst_33 {dimension_numbers = #tpu.dot_dimension_numbers<[1], [0], [0], [1], [0, 0, 1, 1], [], []>} : vector<8x8xbf16>, vector<8x8xbf16>, vector<8x8xf32> -> vector<8x8xf32>
    %62 = arith.addf %58, %61 : vector<8x8xf32>
    %c0_34 = arith.constant 0 : index
    %c8_35 = arith.constant 8 : index
    %63 = vector.load %arg14[%c0_34, %c8_35] : memref<8x32xf32, #tpu.memory_space<vmem>>, vector<8x8xf32>
    tpu.vector_store %arg14[%c0_34, %c8_35], %62 {strides = array<i32>} : memref<8x32xf32, #tpu.memory_space<vmem>>, vector<8x8xf32>,
    %c0_36 = arith.constant 0 : index
    %c1_37 = arith.constant 1 : index
    %64 = vector.load %arg12[%c0_36, %c1_37] : memref<8x4xf32, #tpu.memory_space<vmem>>, vector<8x1xf32>
    tpu.vector_store %arg12[%c0_36, %c1_37], %44 {strides = array<i32>} : memref<8x4xf32, #tpu.memory_space<vmem>>, vector<8x1xf32>,
    %65 = vector.extract_strided_slice %4 {offsets = [0, 16], sizes = [8, 8], strides = [1, 1]} : vector<8x32xbf16> to vector<8x8xbf16>
    %66 = vector.extract_strided_slice %6 {offsets = [0, 16], sizes = [8, 8], strides = [1, 1]} : vector<8x32xbf16> to vector<8x8xbf16>
    %67 = tpu.transpose %66, [1, 0] : vector<8x8xbf16> -> vector<8x8xbf16>
    %cst_38 = arith.constant dense<0.000000e+00> : vector<8x8xf32>
    %68 = tpu.matmul %65, %67, %cst_38 {dimension_numbers = #tpu.dot_dimension_numbers<[1], [0], [0], [1], [0, 0, 1, 1], [], []>} : vector<8x8xbf16>, vector<8x8xbf16>, vector<8x8xf32> -> vector<8x8xf32>
    %c0_39 = arith.constant 0 : index
    %c2 = arith.constant 2 : index
    %69 = vector.load %arg12[%c0_39, %c2] : memref<8x4xf32, #tpu.memory_space<vmem>>, vector<8x1xf32>
    %cst_40 = arith.constant dense<0xFF800000> : vector<8xf32>
    %70 = vector.multi_reduction <maximumf>, %68, %cst_40 [1] : vector<8x8xf32> to vector<8xf32>
    %71 = vector.shape_cast %70 : vector<8xf32> to vector<8x1xf32>
    %72 = arith.maximumf %69, %71 : vector<8x1xf32>
    %73 = arith.subf %69, %72 : vector<8x1xf32>
    %74 = math.exp %73 : vector<8x1xf32>
    %75 = vector.broadcast %72 : vector<8x1xf32> to vector<8x8xf32>
    %76 = arith.subf %68, %75 : vector<8x8xf32>
    %77 = math.exp %76 : vector<8x8xf32>
    %c0_41 = arith.constant 0 : index
    %c2_42 = arith.constant 2 : index
    %78 = vector.load %arg13[%c0_41, %c2_42] : memref<8x4xf32, #tpu.memory_space<vmem>>, vector<8x1xf32>
    %79 = arith.mulf %74, %78 : vector<8x1xf32>
    %cst_43 = arith.constant dense<0.000000e+00> : vector<8xf32>
    %80 = vector.multi_reduction <add>, %77, %cst_43 [1] : vector<8x8xf32> to vector<8xf32>
    %81 = vector.shape_cast %80 : vector<8xf32> to vector<8x1xf32>
    %82 = arith.addf %79, %81 : vector<8x1xf32>
    %c0_44 = arith.constant 0 : index
    %c2_45 = arith.constant 2 : index
    %83 = vector.load %arg13[%c0_44, %c2_45] : memref<8x4xf32, #tpu.memory_space<vmem>>, vector<8x1xf32>
    tpu.vector_store %arg13[%c0_44, %c2_45], %82 {strides = array<i32>} : memref<8x4xf32, #tpu.memory_space<vmem>>, vector<8x1xf32>,
    %c0_46 = arith.constant 0 : index
    %c16 = arith.constant 16 : index
    %84 = vector.load %arg14[%c0_46, %c16] : memref<8x32xf32, #tpu.memory_space<vmem>>, vector<8x8xf32>
    %85 = vector.broadcast %74 : vector<8x1xf32> to vector<8x8xf32>
    %86 = arith.mulf %85, %84 : vector<8x8xf32>
    %87 = arith.truncf %77 : vector<8x8xf32> to vector<8x8xbf16>
    %88 = vector.extract_strided_slice %8 {offsets = [0, 16], sizes = [8, 8], strides = [1, 1]} : vector<8x32xbf16> to vector<8x8xbf16>
    %cst_47 = arith.constant dense<0.000000e+00> : vector<8x8xf32>
    %89 = tpu.matmul %87, %88, %cst_47 {dimension_numbers = #tpu.dot_dimension_numbers<[1], [0], [0], [1], [0, 0, 1, 1], [], []>} : vector<8x8xbf16>, vector<8x8xbf16>, vector<8x8xf32> -> vector<8x8xf32>
    %90 = arith.addf %86, %89 : vector<8x8xf32>
    %c0_48 = arith.constant 0 : index
    %c16_49 = arith.constant 16 : index
    %91 = vector.load %arg14[%c0_48, %c16_49] : memref<8x32xf32, #tpu.memory_space<vmem>>, vector<8x8xf32>
    tpu.vector_store %arg14[%c0_48, %c16_49], %90 {strides = array<i32>} : memref<8x32xf32, #tpu.memory_space<vmem>>, vector<8x8xf32>,
    %c0_50 = arith.constant 0 : index
    %c2_51 = arith.constant 2 : index
    %92 = vector.load %arg12[%c0_50, %c2_51] : memref<8x4xf32, #tpu.memory_space<vmem>>, vector<8x1xf32>
    tpu.vector_store %arg12[%c0_50, %c2_51], %72 {strides = array<i32>} : memref<8x4xf32, #tpu.memory_space<vmem>>, vector<8x1xf32>,
    %93 = vector.extract_strided_slice %4 {offsets = [0, 24], sizes = [8, 8], strides = [1, 1]} : vector<8x32xbf16> to vector<8x8xbf16>
    %94 = vector.extract_strided_slice %6 {offsets = [0, 24], sizes = [8, 8], strides = [1, 1]} : vector<8x32xbf16> to vector<8x8xbf16>
    %95 = tpu.transpose %94, [1, 0] : vector<8x8xbf16> -> vector<8x8xbf16>
    %cst_52 = arith.constant dense<0.000000e+00> : vector<8x8xf32>
    %96 = tpu.matmul %93, %95, %cst_52 {dimension_numbers = #tpu.dot_dimension_numbers<[1], [0], [0], [1], [0, 0, 1, 1], [], []>} : vector<8x8xbf16>, vector<8x8xbf16>, vector<8x8xf32> -> vector<8x8xf32>
    %c0_53 = arith.constant 0 : index
    %c3 = arith.constant 3 : index
    %97 = vector.load %arg12[%c0_53, %c3] : memref<8x4xf32, #tpu.memory_space<vmem>>, vector<8x1xf32>
    %cst_54 = arith.constant dense<0xFF800000> : vector<8xf32>
    %98 = vector.multi_reduction <maximumf>, %96, %cst_54 [1] : vector<8x8xf32> to vector<8xf32>
    %99 = vector.shape_cast %98 : vector<8xf32> to vector<8x1xf32>
    %100 = arith.maximumf %97, %99 : vector<8x1xf32>
    %101 = arith.subf %97, %100 : vector<8x1xf32>
    %102 = math.exp %101 : vector<8x1xf32>
    %103 = vector.broadcast %100 : vector<8x1xf32> to vector<8x8xf32>
    %104 = arith.subf %96, %103 : vector<8x8xf32>
    %105 = math.exp %104 : vector<8x8xf32>
    %c0_55 = arith.constant 0 : index
    %c3_56 = arith.constant 3 : index
    %106 = vector.load %arg13[%c0_55, %c3_56] : memref<8x4xf32, #tpu.memory_space<vmem>>, vector<8x1xf32>
    %107 = arith.mulf %102, %106 : vector<8x1xf32>
    %cst_57 = arith.constant dense<0.000000e+00> : vector<8xf32>
    %108 = vector.multi_reduction <add>, %105, %cst_57 [1] : vector<8x8xf32> to vector<8xf32>
    %109 = vector.shape_cast %108 : vector<8xf32> to vector<8x1xf32>
    %110 = arith.addf %107, %109 : vector<8x1xf32>
    %c0_58 = arith.constant 0 : index
    %c3_59 = arith.constant 3 : index
    %111 = vector.load %arg13[%c0_58, %c3_59] : memref<8x4xf32, #tpu.memory_space<vmem>>, vector<8x1xf32>
    tpu.vector_store %arg13[%c0_58, %c3_59], %110 {strides = array<i32>} : memref<8x4xf32, #tpu.memory_space<vmem>>, vector<8x1xf32>,
    %c0_60 = arith.constant 0 : index
    %c24 = arith.constant 24 : index
    %112 = vector.load %arg14[%c0_60, %c24] : memref<8x32xf32, #tpu.memory_space<vmem>>, vector<8x8xf32>
    %113 = vector.broadcast %102 : vector<8x1xf32> to vector<8x8xf32>
    %114 = arith.mulf %113, %112 : vector<8x8xf32>
    %115 = arith.truncf %105 : vector<8x8xf32> to vector<8x8xbf16>
    %116 = vector.extract_strided_slice %8 {offsets = [0, 24], sizes = [8, 8], strides = [1, 1]} : vector<8x32xbf16> to vector<8x8xbf16>
    %cst_61 = arith.constant dense<0.000000e+00> : vector<8x8xf32>
    %117 = tpu.matmul %115, %116, %cst_61 {dimension_numbers = #tpu.dot_dimension_numbers<[1], [0], [0], [1], [0, 0, 1, 1], [], []>} : vector<8x8xbf16>, vector<8x8xbf16>, vector<8x8xf32> -> vector<8x8xf32>
    %118 = arith.addf %114, %117 : vector<8x8xf32>
    %c0_62 = arith.constant 0 : index
    %c24_63 = arith.constant 24 : index
    %119 = vector.load %arg14[%c0_62, %c24_63] : memref<8x32xf32, #tpu.memory_space<vmem>>, vector<8x8xf32>
    tpu.vector_store %arg14[%c0_62, %c24_63], %118 {strides = array<i32>} : memref<8x32xf32, #tpu.memory_space<vmem>>, vector<8x8xf32>,
    %c0_64 = arith.constant 0 : index
    %c3_65 = arith.constant 3 : index
    %120 = vector.load %arg12[%c0_64, %c3_65] : memref<8x4xf32, #tpu.memory_space<vmem>>, vector<8x1xf32>
    tpu.vector_store %arg12[%c0_64, %c3_65], %100 {strides = array<i32>} : memref<8x4xf32, #tpu.memory_space<vmem>>, vector<8x1xf32>,
    %c0_i32_66 = arith.constant 0 : i32
    %121 = arith.cmpi eq, %arg2, %c0_i32_66 : i32
    %122 = arith.extui %121 : i1 to i32
    %c0_i32_67 = arith.constant 0 : i32
    %123 = arith.cmpi ne, %122, %c0_i32_67 : i32
    scf.if %123 {
      %c0_68 = arith.constant 0 : index
      %c0_69 = arith.constant 0 : index
      %124 = vector.load %arg14[%c0_68, %c0_69] : memref<8x32xf32, #tpu.memory_space<vmem>>, vector<8x8xf32>
      %c0_70 = arith.constant 0 : index
      %c0_71 = arith.constant 0 : index
      %125 = vector.load %arg13[%c0_70, %c0_71] : memref<8x4xf32, #tpu.memory_space<vmem>>, vector<8x1xf32>
      %126 = tpu.reciprocal %125 : vector<8x1xf32> -> vector<8x1xf32>
      %127 = vector.broadcast %126 : vector<8x1xf32> to vector<8x8xf32>
      %128 = arith.mulf %124, %127 : vector<8x8xf32>
      %c0_72 = arith.constant 0 : index
      %c0_73 = arith.constant 0 : index
      %129 = vector.load %arg14[%c0_72, %c0_73] : memref<8x32xf32, #tpu.memory_space<vmem>>, vector<8x8xf32>
      tpu.vector_store %arg14[%c0_72, %c0_73], %128 {strides = array<i32>} : memref<8x32xf32, #tpu.memory_space<vmem>>, vector<8x8xf32>,
      %c0_74 = arith.constant 0 : index
      %c8_75 = arith.constant 8 : index
      %130 = vector.load %arg14[%c0_74, %c8_75] : memref<8x32xf32, #tpu.memory_space<vmem>>, vector<8x8xf32>
      %c0_76 = arith.constant 0 : index
      %c1_77 = arith.constant 1 : index
      %131 = vector.load %arg13[%c0_76, %c1_77] : memref<8x4xf32, #tpu.memory_space<vmem>>, vector<8x1xf32>
      %132 = tpu.reciprocal %131 : vector<8x1xf32> -> vector<8x1xf32>
      %133 = vector.broadcast %132 : vector<8x1xf32> to vector<8x8xf32>
      %134 = arith.mulf %130, %133 : vector<8x8xf32>
      %c0_78 = arith.constant 0 : index
      %c8_79 = arith.constant 8 : index
      %135 = vector.load %arg14[%c0_78, %c8_79] : memref<8x32xf32, #tpu.memory_space<vmem>>, vector<8x8xf32>
      tpu.vector_store %arg14[%c0_78, %c8_79], %134 {strides = array<i32>} : memref<8x32xf32, #tpu.memory_space<vmem>>, vector<8x8xf32>,
      %c0_80 = arith.constant 0 : index
      %c16_81 = arith.constant 16 : index
      %136 = vector.load %arg14[%c0_80, %c16_81] : memref<8x32xf32, #tpu.memory_space<vmem>>, vector<8x8xf32>
      %c0_82 = arith.constant 0 : index
      %c2_83 = arith.constant 2 : index
      %137 = vector.load %arg13[%c0_82, %c2_83] : memref<8x4xf32, #tpu.memory_space<vmem>>, vector<8x1xf32>
      %138 = tpu.reciprocal %137 : vector<8x1xf32> -> vector<8x1xf32>
      %139 = vector.broadcast %138 : vector<8x1xf32> to vector<8x8xf32>
      %140 = arith.mulf %136, %139 : vector<8x8xf32>
      %c0_84 = arith.constant 0 : index
      %c16_85 = arith.constant 16 : index
      %141 = vector.load %arg14[%c0_84, %c16_85] : memref<8x32xf32, #tpu.memory_space<vmem>>, vector<8x8xf32>
      tpu.vector_store %arg14[%c0_84, %c16_85], %140 {strides = array<i32>} : memref<8x32xf32, #tpu.memory_space<vmem>>, vector<8x8xf32>,
      %c0_86 = arith.constant 0 : index
      %c24_87 = arith.constant 24 : index
      %142 = vector.load %arg14[%c0_86, %c24_87] : memref<8x32xf32, #tpu.memory_space<vmem>>, vector<8x8xf32>
      %c0_88 = arith.constant 0 : index
      %c3_89 = arith.constant 3 : index
      %143 = vector.load %arg13[%c0_88, %c3_89] : memref<8x4xf32, #tpu.memory_space<vmem>>, vector<8x1xf32>
      %144 = tpu.reciprocal %143 : vector<8x1xf32> -> vector<8x1xf32>
      %145 = vector.broadcast %144 : vector<8x1xf32> to vector<8x8xf32>
      %146 = arith.mulf %142, %145 : vector<8x8xf32>
      %c0_90 = arith.constant 0 : index
      %c24_91 = arith.constant 24 : index
      %147 = vector.load %arg14[%c0_90, %c24_91] : memref<8x32xf32, #tpu.memory_space<vmem>>, vector<8x8xf32>
      tpu.vector_store %arg14[%c0_90, %c24_91], %146 {strides = array<i32>} : memref<8x32xf32, #tpu.memory_space<vmem>>, vector<8x8xf32>,
      %c0_92 = arith.constant 0 : index
      %c0_93 = arith.constant 0 : index
      %148 = vector.load %arg14[%c0_92, %c0_93] : memref<8x32xf32, #tpu.memory_space<vmem>>, vector<8x32xf32>
      %149 = arith.truncf %148 : vector<8x32xf32> to vector<8x32xbf16>
      %c0_94 = arith.constant 0 : index
      %c0_95 = arith.constant 0 : index
      %c0_96 = arith.constant 0 : index
      %150 = vector.load %arg6[%c0_94, %c0_95, %c0_96] : memref<1x8x32xf32, #tpu.memory_space<vmem>>, vector<1x8x32xf32>
      %151 = vector.shape_cast %150 : vector<1x8x32xf32> to vector<8x32xf32>
      %c0_97 = arith.constant 0 : index
      %c0_98 = arith.constant 0 : index
      %152 = vector.load %arg8[%c0_97, %c0_98] : memref<1x32xf32, #tpu.memory_space<vmem>>, vector<1x32xf32>
      %153 = vector.broadcast %152 : vector<1x32xf32> to vector<8x32xf32>
      %154 = arith.addf %151, %153 : vector<8x32xf32>
      %c0_99 = arith.constant 0 : index
      %c0_100 = arith.constant 0 : index
      %155 = vector.load %arg7[%c0_99, %c0_100] : memref<32x32xbf16, #tpu.memory_space<vmem>>, vector<32x32xbf16>
      %cst_101 = arith.constant dense<0.000000e+00> : vector<8x32xf32>
      %156 = tpu.matmul %149, %155, %cst_101 {dimension_numbers = #tpu.dot_dimension_numbers<[1], [0], [0], [1], [0, 0, 1, 1], [], []>} : vector<8x32xbf16>, vector<32x32xbf16>, vector<8x32xf32> -> vector<8x32xf32>
      %157 = arith.addf %154, %156 : vector<8x32xf32>
      %cst_102 = arith.constant dense<0.000000e+00> : vector<8xf32>
      %158 = vector.multi_reduction <add>, %157, %cst_102 [1] : vector<8x32xf32> to vector<8xf32>
      %159 = vector.shape_cast %158 : vector<8xf32> to vector<8x1xf32>
      %cst_103 = arith.constant 3.200000e+01 : f32
      %160 = vector.broadcast %cst_103 : f32 to vector<8x1xf32>
      %161 = arith.divf %159, %160 : vector<8x1xf32>
      %162 = vector.broadcast %161 : vector<8x1xf32> to vector<8x32xf32>
      %163 = arith.subf %157, %162 : vector<8x32xf32>
      %164 = arith.mulf %163, %163 : vector<8x32xf32>
      %cst_104 = arith.constant dense<0.000000e+00> : vector<8xf32>
      %165 = vector.multi_reduction <add>, %164, %cst_104 [1] : vector<8x32xf32> to vector<8xf32>
      %166 = vector.shape_cast %165 : vector<8xf32> to vector<8x1xf32>
      %cst_105 = arith.constant 3.200000e+01 : f32
      %167 = vector.broadcast %cst_105 : f32 to vector<8x1xf32>
      %168 = arith.divf %166, %167 : vector<8x1xf32>
      %cst_106 = arith.constant 9.99999974E-6 : f32
      %169 = vector.broadcast %cst_106 : f32 to vector<8x1xf32>
      %170 = arith.addf %168, %169 : vector<8x1xf32>
      %171 = math.rsqrt %170 : vector<8x1xf32>
      %172 = vector.broadcast %171 : vector<8x1xf32> to vector<8x32xf32>
      %173 = arith.mulf %163, %172 : vector<8x32xf32>
      %c0_107 = arith.constant 0 : index
      %c0_108 = arith.constant 0 : index
      %174 = vector.load %arg9[%c0_107, %c0_108] : memref<1x32xf32, #tpu.memory_space<vmem>>, vector<1x32xf32>
      %175 = vector.broadcast %174 : vector<1x32xf32> to vector<8x32xf32>
      %176 = arith.mulf %173, %175 : vector<8x32xf32>
      %c0_109 = arith.constant 0 : index
      %c0_110 = arith.constant 0 : index
      %177 = vector.load %arg10[%c0_109, %c0_110] : memref<1x32xf32, #tpu.memory_space<vmem>>, vector<1x32xf32>
      %178 = vector.broadcast %177 : vector<1x32xf32> to vector<8x32xf32>
      %179 = arith.addf %176, %178 : vector<8x32xf32>
      %c0_111 = arith.constant 0 : index
      %c0_112 = arith.constant 0 : index
      %c0_113 = arith.constant 0 : index
      %180 = vector.load %arg11[%c0_111, %c0_112, %c0_113] : memref<1x8x32xf32, #tpu.memory_space<vmem>>, vector<1x8x32xf32>
      %181 = vector.shape_cast %180 : vector<1x8x32xf32> to vector<8x32xf32>
      %182 = vector.shape_cast %179 : vector<8x32xf32> to vector<1x8x32xf32>
      tpu.vector_store %arg11[%c0_111, %c0_112, %c0_113], %182 {strides = array<i32>} : memref<1x8x32xf32, #tpu.memory_space<vmem>>, vector<1x8x32xf32>,
    } else {
    }
    return
  }
  func.func @transform_0(%arg0: i32, %arg1: i32, %arg2: i32) -> (i32, i32, i32) {
    %c0_i32 = arith.constant 0 : i32
    %c0_i32_0 = arith.constant 0 : i32
    return %arg0, %arg1, %c0_i32 : i32, i32, i32
  }
  func.func @transform_1(%arg0: i32, %arg1: i32, %arg2: i32) -> (i32, i32, i32) {
    %c0_i32 = arith.constant 0 : i32
    %c0_i32_0 = arith.constant 0 : i32
    return %arg0, %arg2, %c0_i32 : i32, i32, i32
  }
  func.func @transform_2(%arg0: i32, %arg1: i32, %arg2: i32) -> (i32, i32, i32) {
    %c0_i32 = arith.constant 0 : i32
    %c0_i32_0 = arith.constant 0 : i32
    return %arg0, %arg2, %c0_i32 : i32, i32, i32
  }
  func.func @transform_3(%arg0: i32, %arg1: i32, %arg2: i32) -> (i32, i32, i32) {
    %c0_i32 = arith.constant 0 : i32
    %c0_i32_0 = arith.constant 0 : i32
    return %arg0, %arg1, %c0_i32 : i32, i32, i32
  }
  func.func @transform_4(%arg0: i32, %arg1: i32, %arg2: i32) -> (i32, i32) {
    %c0_i32 = arith.constant 0 : i32
    %c0_i32_0 = arith.constant 0 : i32
    %c0_i32_1 = arith.constant 0 : i32
    return %c0_i32, %c0_i32_0 : i32, i32
  }
  func.func @transform_5(%arg0: i32, %arg1: i32, %arg2: i32) -> (i32, i32) {
    %c0_i32 = arith.constant 0 : i32
    %c0_i32_0 = arith.constant 0 : i32
    %c0_i32_1 = arith.constant 0 : i32
    return %c0_i32, %c0_i32_0 : i32, i32
  }
  func.func @transform_6(%arg0: i32, %arg1: i32, %arg2: i32) -> (i32, i32) {
    %c0_i32 = arith.constant 0 : i32
    %c0_i32_0 = arith.constant 0 : i32
    %c0_i32_1 = arith.constant 0 : i32
    return %c0_i32, %c0_i32_0 : i32, i32
  }
  func.func @transform_7(%arg0: i32, %arg1: i32, %arg2: i32) -> (i32, i32) {
    %c0_i32 = arith.constant 0 : i32
    %c0_i32_0 = arith.constant 0 : i32
    %c0_i32_1 = arith.constant 0 : i32
    return %c0_i32, %c0_i32_0 : i32, i32
  }
  func.func @transform_8(%arg0: i32, %arg1: i32, %arg2: i32) -> (i32, i32, i32) {
    %c0_i32 = arith.constant 0 : i32
    %c0_i32_0 = arith.constant 0 : i32
    return %arg0, %arg1, %c0_i32 : i32, i32, i32
  }
}

</mosaic_0001>

<llo_original>
// kernel: tpu_custom_call.1
$region0: #{tpu_custom_call.1}
  #allocation0 [shape = 'u32[]', space=smem, size = 0x4, offset = 0x4, fixed_abs, tag = 'smem constant byte address 0x4 - core index']
  #allocation1 [shape = 'u32[144,128]{1,0:T(1,128)}', space=vmem, size = 0x12000, scoped, tag = 'internal scratch']
  #allocation2 [shape = 'f32[8,4]{1,0:T(8,128)}', space=vmem, size = 0x1000, scoped, tag = 'scratch operand']
  #allocation3 [shape = 'f32[8,4]{1,0:T(8,128)}', space=vmem, size = 0x1000, scoped, tag = 'scratch operand']
  #allocation4 [shape = 'f32[8,32]{1,0:T(8,128)}', space=vmem, size = 0x1000, scoped, tag = 'scratch operand']
  %s0 = inlined_call_operand.hbm [shape: bf16[2,8,32], index: 0, kind: input, shape index: {}]
  %s1 = inlined_call_operand.hbm [shape: bf16[2,8,32], index: 1, kind: input, shape index: {}]
  %s2 = inlined_call_operand.hbm [shape: bf16[2,8,32], index: 2, kind: input, shape index: {}]
  %s3 = inlined_call_operand.hbm [shape: f32[2,8,32], index: 3, kind: input, shape index: {}]
  %s4 = inlined_call_operand.hbm [shape: bf16[32,32], index: 4, kind: input, shape index: {}]
  %s5 = inlined_call_operand.vmem [shape: f32[1,32], index: 5, kind: input, shape index: {}]
  %s6 = inlined_call_operand.vmem [shape: f32[1,32], index: 6, kind: input, shape index: {}]
  %s7 = inlined_call_operand.vmem [shape: f32[1,32], index: 7, kind: input, shape index: {}]
  %s8 = inlined_call_operand.hbm [shape: f32[2,8,32], index: 8, kind: output, shape index: {}]
  %s9 = sld [smem:[#allocation0]]
  $region93: #{tpu_custom_call.1} parent=0
    _
  %s11 = ssub.s32 1, %s9
  %s12 = scalar_select 0, %s11, %s9
  $region1: #{tpu_custom_call.1} parent=0
    #allocation5 [shape = 'u8[4096]{0}', space=vmem, size = 0x1000, scoped, tag = 'input window, operand 0']
    #allocation6 [shape = 's32[2]{0}', space=sflag, size = 0x8, scoped, tag = 'scoped memory for tpu_custom_call.1']
    #allocation7 [shape = 's32[2]{0}', space=sflag, size = 0x8, scoped, tag = 'scoped memory for tpu_custom_call.1']
    #allocation8 [shape = 'u8[4096]{0}', space=vmem, size = 0x1000, scoped, tag = 'input window, operand 1']
    #allocation9 [shape = 's32[2]{0}', space=sflag, size = 0x8, scoped, tag = 'scoped memory for tpu_custom_call.1']
    #allocation10 [shape = 'u8[4096]{0}', space=vmem, size = 0x1000, scoped, tag = 'input window, operand 2']
    #allocation11 [shape = 'u8[8192]{0}', space=vmem, size = 0x2000, scoped, tag = 'input window, operand 3']
    #allocation12 [shape = 's32[2]{0}', space=sflag, size = 0x8, scoped, tag = 'scoped memory for tpu_custom_call.1']
    #allocation13 [shape = 'u8[8192]{0}', space=vmem, size = 0x2000, scoped, tag = 'input window, operand 4, single buffered']
    #allocation14 [shape = 'u8[8192]{0}', space=vmem, size = 0x2000, scoped, tag = 'output window, operand 0']
    %13 = vsyncpa [#allocation6], 0
    %s14 = scalar_lea.sflag [#allocation6], 1
    %15 = vsyncpa %s14, 0
    %16 = vsyncpa [#allocation9], 0
    %s17 = scalar_lea.sflag [#allocation9], 1
    %18 = vsyncpa %s17, 0
    %19 = vsyncpa [#allocation12], 0
    %s20 = scalar_lea.sflag [#allocation12], 1
    %21 = vsyncpa %s20, 0
    %22 = vsyncpa [#allocation7], 0
    %s23 = scalar_lea.sflag [#allocation7], 1
    %24 = vsyncpa %s23, 0
    loop: start=0, step=1, limit=4
    $region2: #{tpu_custom_call.1} parent=1 // loop_pre_header
      _
    $region3: #{tpu_custom_call.1} parent=1 // loop_header
      %s26 = sphi 0, %s30
      %p27 = scmp.ge.s32.totalorder %s26, 4
      %s33 = sphi 0, %s52
      %s34 = sphi 0, %s48
      %s35 = sphi 0, %s44
      %s36 = sphi 0, %s33
      %s37 = sphi 0, %s34
      %s38 = sphi 0, %s35
      %s39 = sphi 0, %s36
      %s40 = sphi 0, %s37
      %s41 = sphi 0, %s38
      %s57 = sphi 0, %s59
      %s60 = sphi 0, %s57
      %s61 = sphi 0, %s60
      %s77 = sphi 0, %s61
      %s85 = sphi 0, %s87
      %s88 = sphi 0, %s85
      %s89 = sphi 0, %s88
      %s105 = sphi 0, %s89
      %s113 = sphi 0, %s115
      %s116 = sphi 0, %s113
      %s117 = sphi 0, %s116
      %s133 = sphi 0, %s117
      %s141 = sphi 0, %s143
      %s144 = sphi 0, %s141
      %s145 = sphi 0, %s144
      %s161 = sphi 0, %s145
      %s165 = sphi 0, %s165
      %s167 = sphi 0, %s165
      %s168 = sphi 0, %s167
      %s182 = sphi 0, %s168
      %s186 = sphi 0, %s186
      %s188 = sphi 0, %s186
      %s189 = sphi 0, %s188
      %s203 = sphi 0, %s189
      %s207 = sphi 0, %s207
      %s209 = sphi 0, %s207
      %s210 = sphi 0, %s209
      %s224 = sphi 0, %s210
      %s228 = sphi 0, %s228
      %s230 = sphi 0, %s228
      %s231 = sphi 0, %s230
      %s245 = sphi 0, %s231
      %s253 = sphi 0, %s255
      %s256 = sphi 0, %s253
      %s257 = sphi 0, %s256
      %s273 = sphi 0, %s257
    $region4: #{tpu_custom_call.1} parent=1 // loop_header_branch
      %29 = sbr.rel (%p27) target = $region8
    $region5: #{tpu_custom_call.1} parent=1 // loop_body
      %s31 = ssub.s32 %s26, 1
      %s32 = ssub.s32 %s26, 2
      %s42 = sadd.s32 1, %s35
      %p43 = scmp.ge.s32.totalorder %s42, 1
      %s44 = scalar_select %p43, 0, %s42
      %s45 = sadd.s32 1, %s34
      %s46 = scalar_select %p43, %s45, %s34
      %p47 = scmp.ge.s32.totalorder %s46, 1
      %s48 = scalar_select %p47, 0, %s46
      %s49 = sadd.s32 1, %s33
      %s50 = scalar_select %p47, %s49, %s33
      %p51 = scmp.ge.s32.totalorder %s50, 2
      %s52 = scalar_select %p51, 0, %s50
      %s53 = ssub.s32 %s33, %s52
      %s54 = ssub.s32 %s34, %s48
      %s55 = sor.u32 %s53, %s54
      %p56 = scmp.eq.s32.totalorder %s55, 0
      %s58 = sadd.s32 %s57, 1
      %s59 = scalar_select %p56, %s57, %s58
      %p62 = pneg %p56
      %p63 = scmp.eq.s32.totalorder %s26, 1
      %p64 = por %p62, %p63
      %p65 = scmp.ne.s32.totalorder %s57, %s60
      %p66 = scmp.eq.s32.totalorder %s26, 0
      %p67 = por %p65, %p66
      %p68 = scmp.ne.s32.totalorder %s57, %s60
      %p69 = scmp.eq.s32.totalorder %s31, 1
      %p70 = por %p68, %p69
      %p71 = scmp.ne.s32.totalorder %s60, %s61
      %p72 = scmp.eq.s32.totalorder %s31, 0
      %p73 = por %p71, %p72
      %p74 = scmp.ne.s32.totalorder %s60, %s61
      %p75 = scmp.eq.s32.totalorder %s32, 1
      %p76 = por %p74, %p75
      %p78 = scmp.ne.s32.totalorder %s61, %s77
      %p79 = scmp.eq.s32.totalorder %s32, 0
      %p80 = por %p78, %p79
      %s81 = ssub.s32 %s33, %s52
      %s82 = ssub.s32 %s35, %s44
      %s83 = sor.u32 %s81, %s82
      %p84 = scmp.eq.s32.totalorder %s83, 0
      %s86 = sadd.s32 %s85, 1
      %s87 = scalar_select %p84, %s85, %s86
      %p90 = pneg %p84
      %p91 = scmp.eq.s32.totalorder %s26, 1
      %p92 = por %p90, %p91
      %p93 = scmp.ne.s32.totalorder %s85, %s88
      %p94 = scmp.eq.s32.totalorder %s26, 0
      %p95 = por %p93, %p94
      %p96 = scmp.ne.s32.totalorder %s85, %s88
      %p97 = scmp.eq.s32.totalorder %s31, 1
      %p98 = por %p96, %p97
      %p99 = scmp.ne.s32.totalorder %s88, %s89
      %p100 = scmp.eq.s32.totalorder %s31, 0
      %p101 = por %p99, %p100
      %p102 = scmp.ne.s32.totalorder %s88, %s89
      %p103 = scmp.eq.s32.totalorder %s32, 1
      %p104 = por %p102, %p103
      %p106 = scmp.ne.s32.totalorder %s89, %s105
      %p107 = scmp.eq.s32.totalorder %s32, 0
      %p108 = por %p106, %p107
      %s109 = ssub.s32 %s33, %s52
      %s110 = ssub.s32 %s35, %s44
      %s111 = sor.u32 %s109, %s110
      %p112 = scmp.eq.s32.totalorder %s111, 0
      %s114 = sadd.s32 %s113, 1
      %s115 = scalar_select %p112, %s113, %s114
      %p118 = pneg %p112
      %p119 = scmp.eq.s32.totalorder %s26, 1
      %p120 = por %p118, %p119
      %p121 = scmp.ne.s32.totalorder %s113, %s116
      %p122 = scmp.eq.s32.totalorder %s26, 0
      %p123 = por %p121, %p122
      %p124 = scmp.ne.s32.totalorder %s113, %s116
      %p125 = scmp.eq.s32.totalorder %s31, 1
      %p126 = por %p124, %p125
      %p127 = scmp.ne.s32.totalorder %s116, %s117
      %p128 = scmp.eq.s32.totalorder %s31, 0
      %p129 = por %p127, %p128
      %p130 = scmp.ne.s32.totalorder %s116, %s117
      %p131 = scmp.eq.s32.totalorder %s32, 1
      %p132 = por %p130, %p131
      %p134 = scmp.ne.s32.totalorder %s117, %s133
      %p135 = scmp.eq.s32.totalorder %s32, 0
      %p136 = por %p134, %p135
      %s137 = ssub.s32 %s33, %s52
      %s138 = ssub.s32 %s34, %s48
      %s139 = sor.u32 %s137, %s138
      %p140 = scmp.eq.s32.totalorder %s139, 0
      %s142 = sadd.s32 %s141, 1
      %s143 = scalar_select %p140, %s141, %s142
      %p146 = pneg %p140
      %p147 = scmp.eq.s32.totalorder %s26, 1
      %p148 = por %p146, %p147
      %p149 = scmp.ne.s32.totalorder %s141, %s144
      %p150 = scmp.eq.s32.totalorder %s26, 0
      %p151 = por %p149, %p150
      %p152 = scmp.ne.s32.totalorder %s141, %s144
      %p153 = scmp.eq.s32.totalorder %s31, 1
      %p154 = por %p152, %p153
      %p155 = scmp.ne.s32.totalorder %s144, %s145
      %p156 = scmp.eq.s32.totalorder %s31, 0
      %p157 = por %p155, %p156
      %p158 = scmp.ne.s32.totalorder %s144, %s145
      %p159 = scmp.eq.s32.totalorder %s32, 1
      %p160 = por %p158, %p159
      %p162 = scmp.ne.s32.totalorder %s145, %s161
      %p163 = scmp.eq.s32.totalorder %s32, 0
      %p164 = por %p162, %p163
      %s166 = sadd.s32 %s165, 1
      %p169 = scmp.eq.s32.totalorder %s26, 1
      %p170 = scmp.ne.s32.totalorder %s165, %s167
      %p171 = scmp.eq.s32.totalorder %s26, 0
      %p172 = por %p170, %p171
      %p173 = scmp.ne.s32.totalorder %s165, %s167
      %p174 = scmp.eq.s32.totalorder %s31, 1
      %p175 = por %p173, %p174
      %p176 = scmp.ne.s32.totalorder %s167, %s168
      %p177 = scmp.eq.s32.totalorder %s31, 0
      %p178 = por %p176, %p177
      %p179 = scmp.ne.s32.totalorder %s167, %s168
      %p180 = scmp.eq.s32.totalorder %s32, 1
      %p181 = por %p179, %p180
      %p183 = scmp.ne.s32.totalorder %s168, %s182
      %p184 = scmp.eq.s32.totalorder %s32, 0
      %p185 = por %p183, %p184
      %s187 = sadd.s32 %s186, 1
      %p190 = scmp.eq.s32.totalorder %s26, 1
      %p191 = scmp.ne.s32.totalorder %s186, %s188
      %p192 = scmp.eq.s32.totalorder %s26, 0
      %p193 = por %p191, %p192
      %p194 = scmp.ne.s32.totalorder %s186, %s188
      %p195 = scmp.eq.s32.totalorder %s31, 1
      %p196 = por %p194, %p195
      %p197 = scmp.ne.s32.totalorder %s188, %s189
      %p198 = scmp.eq.s32.totalorder %s31, 0
      %p199 = por %p197, %p198
      %p200 = scmp.ne.s32.totalorder %s188, %s189
      %p201 = scmp.eq.s32.totalorder %s32, 1
      %p202 = por %p200, %p201
      %p204 = scmp.ne.s32.totalorder %s189, %s203
      %p205 = scmp.eq.s32.totalorder %s32, 0
      %p206 = por %p204, %p205
      %s208 = sadd.s32 %s207, 1
      %p211 = scmp.eq.s32.totalorder %s26, 1
      %p212 = scmp.ne.s32.totalorder %s207, %s209
      %p213 = scmp.eq.s32.totalorder %s26, 0
      %p214 = por %p212, %p213
      %p215 = scmp.ne.s32.totalorder %s207, %s209
      %p216 = scmp.eq.s32.totalorder %s31, 1
      %p217 = por %p215, %p216
      %p218 = scmp.ne.s32.totalorder %s209, %s210
      %p219 = scmp.eq.s32.totalorder %s31, 0
      %p220 = por %p218, %p219
      %p221 = scmp.ne.s32.totalorder %s209, %s210
      %p222 = scmp.eq.s32.totalorder %s32, 1
      %p223 = por %p221, %p222
      %p225 = scmp.ne.s32.totalorder %s210, %s224
      %p226 = scmp.eq.s32.totalorder %s32, 0
      %p227 = por %p225, %p226
      %s229 = sadd.s32 %s228, 1
      %p232 = scmp.eq.s32.totalorder %s26, 1
      %p233 = scmp.ne.s32.totalorder %s228, %s230
      %p234 = scmp.eq.s32.totalorder %s26, 0
      %p235 = por %p233, %p234
      %p236 = scmp.ne.s32.totalorder %s228, %s230
      %p237 = scmp.eq.s32.totalorder %s31, 1
      %p238 = por %p236, %p237
      %p239 = scmp.ne.s32.totalorder %s230, %s231
      %p240 = scmp.eq.s32.totalorder %s31, 0
      %p241 = por %p239, %p240
      %p242 = scmp.ne.s32.totalorder %s230, %s231
      %p243 = scmp.eq.s32.totalorder %s32, 1
      %p244 = por %p242, %p243
      %p246 = scmp.ne.s32.totalorder %s231, %s245
      %p247 = scmp.eq.s32.totalorder %s32, 0
      %p248 = por %p246, %p247
      %s249 = ssub.s32 %s33, %s52
      %s250 = ssub.s32 %s34, %s48
      %s251 = sor.u32 %s249, %s250
      %p252 = scmp.eq.s32.totalorder %s251, 0
      %s254 = sadd.s32 %s253, 1
      %s255 = scalar_select %p252, %s253, %s254
      %p258 = pneg %p252
      %p259 = scmp.eq.s32.totalorder %s26, 1
      %p260 = por %p258, %p259
      %p261 = scmp.ne.s32.totalorder %s253, %s256
      %p262 = scmp.eq.s32.totalorder %s26, 0
      %p263 = por %p261, %p262
      %p264 = scmp.ne.s32.totalorder %s253, %s256
      %p265 = scmp.eq.s32.totalorder %s31, 1
      %p266 = por %p264, %p265
      %p267 = scmp.ne.s32.totalorder %s256, %s257
      %p268 = scmp.eq.s32.totalorder %s31, 0
      %p269 = por %p267, %p268
      %p270 = scmp.ne.s32.totalorder %s256, %s257
      %p271 = scmp.eq.s32.totalorder %s32, 1
      %p272 = por %p270, %p271
      %p274 = scmp.ne.s32.totalorder %s257, %s273
      %p275 = scmp.eq.s32.totalorder %s32, 0
      %p276 = por %p274, %p275
      %p277 = scmp.le.s32.totalorder 1, %s26
      %p278 = scmp.lt.s32.totalorder %s26, 3
      %p279 = pnand %p277, %p278
      %p280 = pneg %p279
      // Predicated region
      $region9: #{tpu_custom_call.1} parent=5 // pred_check
        _
      $region10: #{tpu_custom_call.1} parent=5 // pred_check_branch
        %282 = sbr.rel (%p279) target = $region12
      $region11: #{tpu_custom_call.1} parent=5 // pred_region
        %s283 = ssub.s32 %s26, 1
        // Predicated region
        $region13: #{tpu_custom_call.1} parent=11 // pred_check
          %p284 = pneg %p178
        $region14: #{tpu_custom_call.1} parent=11 // pred_check_branch
          %286 = sbr.rel (%p284) target = $region16
        $region15: #{tpu_custom_call.1} parent=11 // pred_region
          %s288 = ssub.s32 256, 256
          %289 = vsyncadd [#allocation12], %s288
          %s290 = sshll.u32 [#allocation13], 4
          %s291 = int_to_ptr.vmem [resolvable:$true] %s290
          %296 = dma.hbm_to_vmem [thread:$0]  %s4, 256, %s291, [#allocation12], 64, 64, 4
        $region16: #{tpu_custom_call.1} parent=11 // pred_fallthru
          _
        // Predicated region
        $region17: #{tpu_custom_call.1} parent=11 // pred_check
          %p297 = pneg %p199
        $region18: #{tpu_custom_call.1} parent=11 // pred_check_branch
          %299 = sbr.rel (%p297) target = $region20
        $region19: #{tpu_custom_call.1} parent=11 // pred_region
          _
        $region20: #{tpu_custom_call.1} parent=11 // pred_fallthru
          _
        // Predicated region
        $region21: #{tpu_custom_call.1} parent=11 // pred_check
          %p300 = pneg %p220
        $region22: #{tpu_custom_call.1} parent=11 // pred_check_branch
          %302 = sbr.rel (%p300) target = $region24
        $region23: #{tpu_custom_call.1} parent=11 // pred_region
          _
        $region24: #{tpu_custom_call.1} parent=11 // pred_fallthru
          _
        // Predicated region
        $region25: #{tpu_custom_call.1} parent=11 // pred_check
          %p303 = pneg %p241
        $region26: #{tpu_custom_call.1} parent=11 // pred_check_branch
          %305 = sbr.rel (%p303) target = $region28
        $region27: #{tpu_custom_call.1} parent=11 // pred_region
          _
        $region28: #{tpu_custom_call.1} parent=11 // pred_fallthru
          _
      $region12: #{tpu_custom_call.1} parent=5 // pred_fallthru
        _
      %p306 = scmp.lt.s32.totalorder %s26, 2
      // Predicated region
      $region29: #{tpu_custom_call.1} parent=5 // pred_check
        %p307 = pneg %p306
      $region30: #{tpu_custom_call.1} parent=5 // pred_check_branch
        %309 = sbr.rel (%p307) target = $region32
      $region31: #{tpu_custom_call.1} parent=5 // pred_region
        // Predicated region
        $region33: #{tpu_custom_call.1} parent=31 // pred_check
          %p310 = pneg %p67
        $region34: #{tpu_custom_call.1} parent=31 // pred_check_branch
          %312 = sbr.rel (%p310) target = $region36
        $region35: #{tpu_custom_call.1} parent=31 // pred_region
          %s313 = sand.u32 %s57, 1
          %s314 = scalar_lea.sflag [#allocation6], %s313
          %s315 = sand.u32 %s57, 1
          %s316 = smul.addr %s315, 4
          %s317 = scalar_lea.vmem [#allocation5], %s316
          %s319 = ssub.s32 64, 64
          %320 = vsyncadd %s314, %s319
          %s321 = sadd.s32 %s34, %s33
          %s322 = smul.addr %s321, 64
          %s323 = scalar_lea.hbm %s0, %s322
          %s325 = sshll.u32 %s317, 4
          %s326 = int_to_ptr.vmem [resolvable:$true] %s325
          %328 = dma.hbm_to_vmem [thread:$0]  %s323, 64, %s326, %s314
        $region36: #{tpu_custom_call.1} parent=31 // pred_fallthru
          _
        // Predicated region
        $region37: #{tpu_custom_call.1} parent=31 // pred_check
          %p329 = pneg %p95
        $region38: #{tpu_custom_call.1} parent=31 // pred_check_branch
          %331 = sbr.rel (%p329) target = $region40
        $region39: #{tpu_custom_call.1} parent=31 // pred_region
          %s332 = sand.u32 %s26, 1
          %s333 = scalar_lea.sflag [#allocation9], %s332
          %s334 = sand.u32 %s85, 1
          %s335 = smul.addr %s334, 4
          %s336 = scalar_lea.vmem [#allocation8], %s335
          %s338 = ssub.s32 64, 64
          %339 = vsyncadd %s333, %s338
          %s340 = sadd.s32 %s35, %s33
          %s341 = smul.addr %s340, 64
          %s342 = scalar_lea.hbm %s1, %s341
          %s344 = sshll.u32 %s336, 4
          %s345 = int_to_ptr.vmem [resolvable:$true] %s344
          %347 = dma.hbm_to_vmem [thread:$0]  %s342, 64, %s345, %s333
        $region40: #{tpu_custom_call.1} parent=31 // pred_fallthru
          _
        // Predicated region
        $region41: #{tpu_custom_call.1} parent=31 // pred_check
          %p348 = pneg %p123
        $region42: #{tpu_custom_call.1} parent=31 // pred_check_branch
          %350 = sbr.rel (%p348) target = $region44
        $region43: #{tpu_custom_call.1} parent=31 // pred_region
          %s351 = sand.u32 %s26, 1
          %s352 = scalar_lea.sflag [#allocation9], %s351
          %s353 = sand.u32 %s113, 1
          %s354 = smul.addr %s353, 4
          %s355 = scalar_lea.vmem [#allocation10], %s354
          %s357 = ssub.s32 64, 64
          %358 = vsyncadd %s352, %s357
          %s359 = sadd.s32 %s35, %s33
          %s360 = smul.addr %s359, 64
          %s361 = scalar_lea.hbm %s2, %s360
          %s363 = sshll.u32 %s355, 4
          %s364 = int_to_ptr.vmem [resolvable:$true] %s363
          %366 = dma.hbm_to_vmem [thread:$0]  %s361, 64, %s364, %s352
        $region44: #{tpu_custom_call.1} parent=31 // pred_fallthru
          _
        // Predicated region
        $region45: #{tpu_custom_call.1} parent=31 // pred_check
          %p367 = pneg %p151
        $region46: #{tpu_custom_call.1} parent=31 // pred_check_branch
          %369 = sbr.rel (%p367) target = $region48
        $region47: #{tpu_custom_call.1} parent=31 // pred_region
          %s370 = sand.u32 %s26, 1
          %s371 = scalar_lea.sflag [#allocation12], %s370
          %s372 = sand.u32 %s141, 1
          %s373 = smul.addr %s372, 8
          %s374 = scalar_lea.vmem [#allocation11], %s373
          %s376 = ssub.s32 128, 128
          %377 = vsyncadd %s371, %s376
          %s378 = sadd.s32 %s34, %s33
          %s379 = smul.addr %s378, 128
          %s380 = scalar_lea.hbm %s3, %s379
          %s382 = sshll.u32 %s374, 4
          %s383 = int_to_ptr.vmem [resolvable:$true] %s382
          %385 = dma.hbm_to_vmem [thread:$0]  %s380, 128, %s383, %s371
        $region48: #{tpu_custom_call.1} parent=31 // pred_fallthru
          _
      $region32: #{tpu_custom_call.1} parent=5 // pred_fallthru
        _
      %p386 = scmp.le.s32.totalorder 1, %s26
      %p387 = scmp.lt.s32.totalorder %s26, 3
      %p388 = pnand %p386, %p387
      %p389 = pneg %p388
      // Predicated region
      $region49: #{tpu_custom_call.1} parent=5 // pred_check
        _
      $region50: #{tpu_custom_call.1} parent=5 // pred_check_branch
        %391 = sbr.rel (%p388) target = $region52
      $region51: #{tpu_custom_call.1} parent=5 // pred_region
        %s392 = ssub.s32 %s26, 1
        %s393 = sand.u32 %s60, 1
        %s394 = scalar_lea.sflag [#allocation6], %s393
        %s395 = sand.u32 %s60, 1
        %s396 = smul.addr %s395, 4
        %s397 = scalar_lea.vmem [#allocation5], %s396
        // Predicated region
        $region53: #{tpu_custom_call.1} parent=51 // pred_check
          %p398 = pneg %p73
        $region54: #{tpu_custom_call.1} parent=51 // pred_check_branch
          %400 = sbr.rel (%p398) target = $region56
        $region55: #{tpu_custom_call.1} parent=51 // pred_region
          %401 = dma.done %s394, 64
        $region56: #{tpu_custom_call.1} parent=51 // pred_fallthru
          _
        %s402 = sand.u32 %s31, 1
        %s403 = scalar_lea.sflag [#allocation9], %s402
        %s404 = sand.u32 %s88, 1
        %s405 = smul.addr %s404, 4
        %s406 = scalar_lea.vmem [#allocation8], %s405
        // Predicated region
        $region57: #{tpu_custom_call.1} parent=51 // pred_check
          %p407 = pneg %p101
        $region58: #{tpu_custom_call.1} parent=51 // pred_check_branch
          %409 = sbr.rel (%p407) target = $region60
        $region59: #{tpu_custom_call.1} parent=51 // pred_region
          %410 = dma.done %s403, 64
        $region60: #{tpu_custom_call.1} parent=51 // pred_fallthru
          _
        %s411 = sand.u32 %s31, 1
        %s412 = scalar_lea.sflag [#allocation9], %s411
        %s413 = sand.u32 %s116, 1
        %s414 = smul.addr %s413, 4
        %s415 = scalar_lea.vmem [#allocation10], %s414
        // Predicated region
        $region61: #{tpu_custom_call.1} parent=51 // pred_check
          %p416 = pneg %p129
        $region62: #{tpu_custom_call.1} parent=51 // pred_check_branch
          %418 = sbr.rel (%p416) target = $region64
        $region63: #{tpu_custom_call.1} parent=51 // pred_region
          %419 = dma.done %s412, 64
        $region64: #{tpu_custom_call.1} parent=51 // pred_fallthru
          _
        %s420 = sand.u32 %s31, 1
        %s421 = scalar_lea.sflag [#allocation12], %s420
        %s422 = sand.u32 %s144, 1
        %s423 = smul.addr %s422, 8
        %s424 = scalar_lea.vmem [#allocation11], %s423
        // Predicated region
        $region65: #{tpu_custom_call.1} parent=51 // pred_check
          %p425 = pneg %p157
        $region66: #{tpu_custom_call.1} parent=51 // pred_check_branch
          %427 = sbr.rel (%p425) target = $region68
        $region67: #{tpu_custom_call.1} parent=51 // pred_region
          %428 = dma.done %s421, 128
        $region68: #{tpu_custom_call.1} parent=51 // pred_fallthru
          _
        // Predicated region
        $region69: #{tpu_custom_call.1} parent=51 // pred_check
          %p429 = pneg %p178
        $region70: #{tpu_custom_call.1} parent=51 // pred_check_branch
          %431 = sbr.rel (%p429) target = $region72
        $region71: #{tpu_custom_call.1} parent=51 // pred_region
          %432 = dma.done [#allocation12], 256
        $region72: #{tpu_custom_call.1} parent=51 // pred_fallthru
          _
        %s433 = sand.u32 %s60, 1
        %s434 = scalar_lea.sflag [#allocation6], %s433
        %s435 = sand.u32 %s60, 1
        %s436 = smul.addr %s435, 4
        %s437 = scalar_lea.vmem [#allocation5], %s436
        %p438 = pneg %p73
        %p439 = pneg %p70
        %s440 = sand.u32 %s31, 1
        %s441 = scalar_lea.sflag [#allocation9], %s440
        %s442 = sand.u32 %s88, 1
        %s443 = smul.addr %s442, 4
        %s444 = scalar_lea.vmem [#allocation8], %s443
        %p445 = pneg %p101
        %p446 = pneg %p98
        %s447 = sand.u32 %s31, 1
        %s448 = scalar_lea.sflag [#allocation9], %s447
        %s449 = sand.u32 %s116, 1
        %s450 = smul.addr %s449, 4
        %s451 = scalar_lea.vmem [#allocation10], %s450
        %p452 = pneg %p129
        %p453 = pneg %p126
        %s454 = sand.u32 %s31, 1
        %s455 = scalar_lea.sflag [#allocation12], %s454
        %s456 = sand.u32 %s144, 1
        %s457 = smul.addr %s456, 8
        %s458 = scalar_lea.vmem [#allocation11], %s457
        %p459 = pneg %p157
        %p460 = pneg %p154
        %p461 = pneg %p178
        %p462 = pneg %p175
        %p463 = pneg %p199
        %p464 = pneg %p196
        %p465 = pneg %p220
        %p466 = pneg %p217
        %p467 = pneg %p241
        %p468 = pneg %p238
        %p469 = pneg %p269
        %p470 = pneg %p266
        %s471 = sand.u32 %s256, 1
        %s472 = scalar_lea.sflag [#allocation7], %s471
        %s473 = sand.u32 %s256, 1
        %s474 = smul.addr %s473, 8
        %s475 = scalar_lea.vmem [#allocation14], %s474
        %p477 = scmp.eq.s32.totalorder %s38, 0
        // Predicated region
        $region73: #{tpu_custom_call.1} parent=51 // pred_check
          %p478 = pneg %p477
        $region74: #{tpu_custom_call.1} parent=51 // pred_check_branch
          %480 = sbr.rel (%p478) target = $region76
        $region75: #{tpu_custom_call.1} parent=51 // pred_region
          %vm481 = vcmask 31744
          %482 = vst.msk [vmem:[#allocation2] sm:$0xff] %vm481, -inf
          %483 = vst.msk [vmem:[#allocation3] sm:$0xff] %vm481, 0.0
          %vm484 = vcmask 261120
          %485 = vst.msk [vmem:[#allocation4] sm:$0xff] %vm484, 0.0
        $region76: #{tpu_custom_call.1} parent=51 // pred_fallthru
          _
        %v486 = vld [vmem:[%s397] sm:$0xf]
        %v487 = vld [vmem:[%s406] sm:$0xf]
        %v488 = vld [vmem:[%s415] sm:$0xf]
        %vm489 = vcmask 64512
        %v491 = vsel %vm489, %v486, 0
        %v494 = vsel %vm489, %v487, 0
        %496 = vmatprep.subr.bf16.mxu0 0
        %497 = vmatpush1.bf16.xpose.msra.mxu0 %v494
        %498 = vmatprep.subr.bf16.mxu0 0
        %499 = vmatpush1.bf16.xpose.msra.mxu0 0
        %500 = vmatprep.subr.bf16.mxu0 0
        %501 = vmatpush1.bf16.xpose.msra.mxu0 0
        %502 = vmatprep.subr.bf16.mxu0 0
        %503 = vmatpush1.bf16.xpose.msra.mxu0 0
        %504 = vmatprep.subr.bf16.mxu0 0
        %505 = vmatpush1.bf16.xpose.msra.mxu0 0
        %506 = vmatprep.subr.bf16.mxu0 0
        %507 = vmatpush1.bf16.xpose.msra.mxu0 0
        %508 = vmatprep.subr.bf16.mxu0 0
        %509 = vmatpush1.bf16.xpose.msra.mxu0 0
        %510 = vmatprep.subr.bf16.mxu0 0
        %511 = vmatpush1.bf16.xpose.msra.mxu0 0
        %512 = vmatprep.subr.bf16.mxu0 0
        %513 = vmatpush1.bf16.xpose.msra.mxu0 0
        %514 = vmatprep.subr.bf16.mxu0 0
        %515 = vmatpush1.bf16.xpose.msra.mxu0 0
        %516 = vmatprep.subr.bf16.mxu0 0
        %517 = vmatpush1.bf16.xpose.msra.mxu0 0
        %518 = vmatprep.subr.bf16.mxu0 0
        %519 = vmatpush1.bf16.xpose.msra.mxu0 0
        %520 = vmatprep.subr.bf16.mxu0 0
        %521 = vmatpush1.bf16.xpose.msra.mxu0 0
        %522 = vmatprep.subr.bf16.mxu0 0
        %523 = vmatpush1.bf16.xpose.msra.mxu0 0
        %524 = vmatprep.subr.bf16.mxu0 0
        %525 = vmatpush1.bf16.xpose.msra.mxu0 0
        %526 = vmatprep.subr.bf16.mxu0 0
        %527 = vmatpush1.bf16.xpose.msra.mxu0 0
        %528 = vmatprep.mubr.bf16.mxu0 0
        %529 = vmatmul.mubr.bf16.gmra.mrb[0].mxu0 %v491
        %v530 = vpop.f32.mrb[0].mxu0
        %v531 = vadd.f32 0.0, %v530
        %v532 = vpop.f32.mrb[0].mxu0
        %v533 = vpop.f32.mrb[0].mxu0
        %v534 = vpop.f32.mrb[0].mxu0
        %535 = vdwg.mxu0
        %v536 = vld [vmem:[#allocation2] sm:$0xff]
        %v537 = vsel %vm489, %v531, -inf
        %538 = vmax.xlane.f32.xlu0 %v537
        %v539 = vpop.xlane.xlu0 %538
        %v540 = vmax.f32 %v536, %v539
        %v541 = vsub.f32 %v536, %v540
        %v542 = vmul.f32 %v541, 1.442695
        %v543 = vpow.pop %v542
        %545 = vset.pattern.permute.xlu0 0
        %546 = vperm.xlu0 %545, %v540
        %v547 = vpop.permute.xlu0 %546
        %v549 = vsub.f32 %v531, %v547
        %v550 = vmul.f32 %v549, 1.442695
        %v551 = vpow.pop %v550
        %v552 = vld [vmem:[#allocation3] sm:$0xff]
        %v553 = vmul.f32 %v543, %v552
        %v554 = vsel %vm489, %v551, 0.0
        %555 = vadd.xlane.f32.xlu0 %v554
        %v556 = vpop.xlane.xlu0 %555
        %v557 = vadd.f32 %v553, %v556
        %vm558 = vcmask 7168
        %559 = vst.msk [vmem:[#allocation3] sm:$0xff] %vm558, %v557
        %v560 = vld [vmem:[#allocation4] sm:$0xff]
        %562 = vset.pattern.permute.xlu0 0
        %563 = vperm.xlu0 %562, %v543
        %v564 = vpop.permute.xlu0 %563
        %v566 = vmul.f32 %v564, %v560
        %v567 = vpack.c.bf16 %v551, %v551
        %v569 = vsel %vm489, %v567, 0
        %vm571 = vcmask 1043456
        %v573 = vsel %vm571, %v488, 0
        %575 = vmatprep.subr.bf16.mxu0 0
        %576 = vmatpush1.bf16.msra.mxu0 %v573
        %577 = vmatprep.subr.bf16.mxu0 0
        %578 = vmatpush1.bf16.msra.mxu0 0
        %579 = vmatprep.subr.bf16.mxu0 0
        %580 = vmatpush1.bf16.msra.mxu0 0
        %581 = vmatprep.subr.bf16.mxu0 0
        %582 = vmatpush1.bf16.msra.mxu0 0
        %583 = vmatprep.subr.bf16.mxu0 0
        %584 = vmatpush1.bf16.msra.mxu0 0
        %585 = vmatprep.subr.bf16.mxu0 0
        %586 = vmatpush1.bf16.msra.mxu0 0
        %587 = vmatprep.subr.bf16.mxu0 0
        %588 = vmatpush1.bf16.msra.mxu0 0
        %589 = vmatprep.subr.bf16.mxu0 0
        %590 = vmatpush1.bf16.msra.mxu0 0
        %591 = vmatprep.subr.bf16.mxu0 0
        %592 = vmatpush1.bf16.msra.mxu0 0
        %593 = vmatprep.subr.bf16.mxu0 0
        %594 = vmatpush1.bf16.msra.mxu0 0
        %595 = vmatprep.subr.bf16.mxu0 0
        %596 = vmatpush1.bf16.msra.mxu0 0
        %597 = vmatprep.subr.bf16.mxu0 0
        %598 = vmatpush1.bf16.msra.mxu0 0
        %599 = vmatprep.subr.bf16.mxu0 0
        %600 = vmatpush1.bf16.msra.mxu0 0
        %601 = vmatprep.subr.bf16.mxu0 0
        %602 = vmatpush1.bf16.msra.mxu0 0
        %603 = vmatprep.subr.bf16.mxu0 0
        %604 = vmatpush1.bf16.msra.mxu0 0
        %605 = vmatprep.subr.bf16.mxu0 0
        %606 = vmatpush1.bf16.msra.mxu0 0
        %607 = vmatprep.mubr.bf16.mxu0 0
        %608 = vmatmul.mubr.bf16.gmra.mrb[0].mxu0 %v569
        %v609 = vpop.f32.mrb[0].mxu0
        %v610 = vadd.f32 0.0, %v609
        %v611 = vpop.f32.mrb[0].mxu0
        %v612 = vpop.f32.mrb[0].mxu0
        %v613 = vpop.f32.mrb[0].mxu0
        %614 = vdwg.mxu0
        %v615 = vadd.f32 %v566, %v610
        %616 = vst.msk [vmem:[#allocation4] sm:$0xff] %vm489, %v615
        %617 = vst.msk [vmem:[#allocation2] sm:$0xff] %vm558, %v540
        %v619 = vunpack.c.l.b16 %v486
        %v620 = vpack.c.b16 %v619, %v619
        %621 = vrot.lane.b32.xlu0 %v620, 120
        %v622 = vpop.permute.xlu0 %621
        %v624 = vunpack.c.l.b16 %v487
        %v625 = vpack.c.b16 %v624, %v624
        %626 = vrot.lane.b32.xlu0 %v625, 120
        %v627 = vpop.permute.xlu0 %626
        %v629 = vsel %vm489, %v622, 0
        %v632 = vsel %vm489, %v627, 0
        %634 = vmatprep.subr.bf16.mxu0 0
        %635 = vmatpush1.bf16.xpose.msra.mxu0 %v632
        %636 = vmatprep.subr.bf16.mxu0 0
        %637 = vmatpush1.bf16.xpose.msra.mxu0 0
        %638 = vmatprep.subr.bf16.mxu0 0
        %639 = vmatpush1.bf16.xpose.msra.mxu0 0
        %640 = vmatprep.subr.bf16.mxu0 0
        %641 = vmatpush1.bf16.xpose.msra.mxu0 0
        %642 = vmatprep.subr.bf16.mxu0 0
        %643 = vmatpush1.bf16.xpose.msra.mxu0 0
        %644 = vmatprep.subr.bf16.mxu0 0
        %645 = vmatpush1.bf16.xpose.msra.mxu0 0
        %646 = vmatprep.subr.bf16.mxu0 0
        %647 = vmatpush1.bf16.xpose.msra.mxu0 0
        %648 = vmatprep.subr.bf16.mxu0 0
        %649 = vmatpush1.bf16.xpose.msra.mxu0 0
        %650 = vmatprep.subr.bf16.mxu0 0
        %651 = vmatpush1.bf16.xpose.msra.mxu0 0
        %652 = vmatprep.subr.bf16.mxu0 0
        %653 = vmatpush1.bf16.xpose.msra.mxu0 0
        %654 = vmatprep.subr.bf16.mxu0 0
        %655 = vmatpush1.bf16.xpose.msra.mxu0 0
        %656 = vmatprep.subr.bf16.mxu0 0
        %657 = vmatpush1.bf16.xpose.msra.mxu0 0
        %658 = vmatprep.subr.bf16.mxu0 0
        %659 = vmatpush1.bf16.xpose.msra.mxu0 0
        %660 = vmatprep.subr.bf16.mxu0 0
        %661 = vmatpush1.bf16.xpose.msra.mxu0 0
        %662 = vmatprep.subr.bf16.mxu0 0
        %663 = vmatpush1.bf16.xpose.msra.mxu0 0
        %664 = vmatprep.subr.bf16.mxu0 0
        %665 = vmatpush1.bf16.xpose.msra.mxu0 0
        %666 = vmatprep.mubr.bf16.mxu0 0
        %667 = vmatmul.mubr.bf16.gmra.mrb[0].mxu0 %v629
        %v668 = vpop.f32.mrb[0].mxu0
        %v669 = vadd.f32 0.0, %v668
        %v670 = vpop.f32.mrb[0].mxu0
        %v671 = vpop.f32.mrb[0].mxu0
        %v672 = vpop.f32.mrb[0].mxu0
        %673 = vdwg.mxu0
        %v674 = vld [vmem:[#allocation2] sm:$0xff]
        %v675 = vsel %vm489, %v669, -inf
        %676 = vmax.xlane.f32.xlu0 %v675
        %v677 = vpop.xlane.xlu0 %676
        %v678 = vmax.f32 %v674, %v677
        %v679 = vsub.f32 %v674, %v678
        %v680 = vmul.f32 %v679, 1.442695
        %v681 = vpow.pop %v680
        %683 = vset.pattern.permute.xlu0 1
        %684 = vperm.xlu0 %683, %v678
        %v685 = vpop.permute.xlu0 %684
        %v687 = vsub.f32 %v669, %v685
        %v688 = vmul.f32 %v687, 1.442695
        %v689 = vpow.pop %v688
        %v690 = vld [vmem:[#allocation3] sm:$0xff]
        %v691 = vmul.f32 %v681, %v690
        %v692 = vsel %vm489, %v689, 0.0
        %693 = vadd.xlane.f32.xlu0 %v692
        %v694 = vpop.xlane.xlu0 %693
        %v695 = vadd.f32 %v691, %v694
        %vm696 = vcmask 15368
        %697 = vst.msk [vmem:[#allocation3] sm:$0xff] %vm696, %v695
        %v698 = vld [vmem:[#allocation4] sm:$0xff]
        %700 = vset.pattern.permute.xlu0 1
        %701 = vperm.xlu0 %700, %v681
        %v702 = vpop.permute.xlu0 %701
        %v704 = vmul.f32 %v702, %v698
        %v705 = vpack.c.bf16 %v689, %v689
        %v707 = vunpack.c.l.b16 %v488
        %v708 = vpack.c.b16 %v707, %v707
        %709 = vrot.lane.b32.xlu0 %v708, 120
        %v710 = vpop.permute.xlu0 %709
        %v712 = vsel %vm489, %v705, 0
        %v715 = vsel %vm571, %v710, 0
        %717 = vmatprep.subr.bf16.mxu0 0
        %718 = vmatpush1.bf16.msra.mxu0 %v715
        %719 = vmatprep.subr.bf16.mxu0 0
        %720 = vmatpush1.bf16.msra.mxu0 0
        %721 = vmatprep.subr.bf16.mxu0 0
        %722 = vmatpush1.bf16.msra.mxu0 0
        %723 = vmatprep.subr.bf16.mxu0 0
        %724 = vmatpush1.bf16.msra.mxu0 0
        %725 = vmatprep.subr.bf16.mxu0 0
        %726 = vmatpush1.bf16.msra.mxu0 0
        %727 = vmatprep.subr.bf16.mxu0 0
        %728 = vmatpush1.bf16.msra.mxu0 0
        %729 = vmatprep.subr.bf16.mxu0 0
        %730 = vmatpush1.bf16.msra.mxu0 0
        %731 = vmatprep.subr.bf16.mxu0 0
        %732 = vmatpush1.bf16.msra.mxu0 0
        %733 = vmatprep.subr.bf16.mxu0 0
        %734 = vmatpush1.bf16.msra.mxu0 0
        %735 = vmatprep.subr.bf16.mxu0 0
        %736 = vmatpush1.bf16.msra.mxu0 0
        %737 = vmatprep.subr.bf16.mxu0 0
        %738 = vmatpush1.bf16.msra.mxu0 0
        %739 = vmatprep.subr.bf16.mxu0 0
        %740 = vmatpush1.bf16.msra.mxu0 0
        %741 = vmatprep.subr.bf16.mxu0 0
        %742 = vmatpush1.bf16.msra.mxu0 0
        %743 = vmatprep.subr.bf16.mxu0 0
        %744 = vmatpush1.bf16.msra.mxu0 0
        %745 = vmatprep.subr.bf16.mxu0 0
        %746 = vmatpush1.bf16.msra.mxu0 0
        %747 = vmatprep.subr.bf16.mxu0 0
        %748 = vmatpush1.bf16.msra.mxu0 0
        %749 = vmatprep.mubr.bf16.mxu0 0
        %750 = vmatmul.mubr.bf16.gmra.mrb[0].mxu0 %v712
        %v751 = vpop.f32.mrb[0].mxu0
        %v752 = vadd.f32 0.0, %v751
        %v753 = vpop.f32.mrb[0].mxu0
        %v754 = vpop.f32.mrb[0].mxu0
        %v755 = vpop.f32.mrb[0].mxu0
        %756 = vdwg.mxu0
        %758 = vrot.lane.b32.xlu0 %v752, 8
        %v759 = vpop.permute.xlu0 %758
        %v761 = vadd.f32 %v704, %v759
        %vm762 = vcmask 130112
        %763 = vst.msk [vmem:[#allocation4] sm:$0xff] %vm762, %v761
        %764 = vst.msk [vmem:[#allocation2] sm:$0xff] %vm696, %v678
        %765 = vrot.lane.b32.xlu0 %v620, 112
        %v766 = vpop.permute.xlu0 %765
        %767 = vrot.lane.b32.xlu0 %v625, 112
        %v768 = vpop.permute.xlu0 %767
        %v770 = vsel %vm489, %v766, 0
        %v773 = vsel %vm489, %v768, 0
        %775 = vmatprep.subr.bf16.mxu0 0
        %776 = vmatpush1.bf16.xpose.msra.mxu0 %v773
        %777 = vmatprep.subr.bf16.mxu0 0
        %778 = vmatpush1.bf16.xpose.msra.mxu0 0
        %779 = vmatprep.subr.bf16.mxu0 0
        %780 = vmatpush1.bf16.xpose.msra.mxu0 0
        %781 = vmatprep.subr.bf16.mxu0 0
        %782 = vmatpush1.bf16.xpose.msra.mxu0 0
        %783 = vmatprep.subr.bf16.mxu0 0
        %784 = vmatpush1.bf16.xpose.msra.mxu0 0
        %785 = vmatprep.subr.bf16.mxu0 0
        %786 = vmatpush1.bf16.xpose.msra.mxu0 0
        %787 = vmatprep.subr.bf16.mxu0 0
        %788 = vmatpush1.bf16.xpose.msra.mxu0 0
        %789 = vmatprep.subr.bf16.mxu0 0
        %790 = vmatpush1.bf16.xpose.msra.mxu0 0
        %791 = vmatprep.subr.bf16.mxu0 0
        %792 = vmatpush1.bf16.xpose.msra.mxu0 0
        %793 = vmatprep.subr.bf16.mxu0 0
        %794 = vmatpush1.bf16.xpose.msra.mxu0 0
        %795 = vmatprep.subr.bf16.mxu0 0
        %796 = vmatpush1.bf16.xpose.msra.mxu0 0
        %797 = vmatprep.subr.bf16.mxu0 0
        %798 = vmatpush1.bf16.xpose.msra.mxu0 0
        %799 = vmatprep.subr.bf16.mxu0 0
        %800 = vmatpush1.bf16.xpose.msra.mxu0 0
        %801 = vmatprep.subr.bf16.mxu0 0
        %802 = vmatpush1.bf16.xpose.msra.mxu0 0
        %803 = vmatprep.subr.bf16.mxu0 0
        %804 = vmatpush1.bf16.xpose.msra.mxu0 0
        %805 = vmatprep.subr.bf16.mxu0 0
        %806 = vmatpush1.bf16.xpose.msra.mxu0 0
        %807 = vmatprep.mubr.bf16.mxu0 0
        %808 = vmatmul.mubr.bf16.gmra.mrb[0].mxu0 %v770
        %v809 = vpop.f32.mrb[0].mxu0
        %v810 = vadd.f32 0.0, %v809
        %v811 = vpop.f32.mrb[0].mxu0
        %v812 = vpop.f32.mrb[0].mxu0
        %v813 = vpop.f32.mrb[0].mxu0
        %814 = vdwg.mxu0
        %v815 = vld [vmem:[#allocation2] sm:$0xff]
        %v816 = vsel %vm489, %v810, -inf
        %817 = vmax.xlane.f32.xlu0 %v816
        %v818 = vpop.xlane.xlu0 %817
        %v819 = vmax.f32 %v815, %v818
        %v820 = vsub.f32 %v815, %v819
        %v821 = vmul.f32 %v820, 1.442695
        %v822 = vpow.pop %v821
        %824 = vset.pattern.permute.xlu0 2
        %825 = vperm.xlu0 %824, %v819
        %v826 = vpop.permute.xlu0 %825
        %v828 = vsub.f32 %v810, %v826
        %v829 = vmul.f32 %v828, 1.442695
        %v830 = vpow.pop %v829
        %v831 = vld [vmem:[#allocation3] sm:$0xff]
        %v832 = vmul.f32 %v822, %v831
        %v833 = vsel %vm489, %v830, 0.0
        %834 = vadd.xlane.f32.xlu0 %v833
        %v835 = vpop.xlane.xlu0 %834
        %v836 = vadd.f32 %v832, %v835
        %vm837 = vcmask 23568
        %838 = vst.msk [vmem:[#allocation3] sm:$0xff] %vm837, %v836
        %v839 = vld [vmem:[#allocation4] sm:$0xff]
        %841 = vset.pattern.permute.xlu0 2
        %842 = vperm.xlu0 %841, %v822
        %v843 = vpop.permute.xlu0 %842
        %v845 = vmul.f32 %v843, %v839
        %v846 = vpack.c.bf16 %v830, %v830
        %847 = vrot.lane.b32.xlu0 %v708, 112
        %v848 = vpop.permute.xlu0 %847
        %v850 = vsel %vm489, %v846, 0
        %v853 = vsel %vm571, %v848, 0
        %855 = vmatprep.subr.bf16.mxu0 0
        %856 = vmatpush1.bf16.msra.mxu0 %v853
        %857 = vmatprep.subr.bf16.mxu0 0
        %858 = vmatpush1.bf16.msra.mxu0 0
        %859 = vmatprep.subr.bf16.mxu0 0
        %860 = vmatpush1.bf16.msra.mxu0 0
        %861 = vmatprep.subr.bf16.mxu0 0
        %862 = vmatpush1.bf16.msra.mxu0 0
        %863 = vmatprep.subr.bf16.mxu0 0
        %864 = vmatpush1.bf16.msra.mxu0 0
        %865 = vmatprep.subr.bf16.mxu0 0
        %866 = vmatpush1.bf16.msra.mxu0 0
        %867 = vmatprep.subr.bf16.mxu0 0
        %868 = vmatpush1.bf16.msra.mxu0 0
        %869 = vmatprep.subr.bf16.mxu0 0
        %870 = vmatpush1.bf16.msra.mxu0 0
        %871 = vmatprep.subr.bf16.mxu0 0
        %872 = vmatpush1.bf16.msra.mxu0 0
        %873 = vmatprep.subr.bf16.mxu0 0
        %874 = vmatpush1.bf16.msra.mxu0 0
        %875 = vmatprep.subr.bf16.mxu0 0
        %876 = vmatpush1.bf16.msra.mxu0 0
        %877 = vmatprep.subr.bf16.mxu0 0
        %878 = vmatpush1.bf16.msra.mxu0 0
        %879 = vmatprep.subr.bf16.mxu0 0
        %880 = vmatpush1.bf16.msra.mxu0 0
        %881 = vmatprep.subr.bf16.mxu0 0
        %882 = vmatpush1.bf16.msra.mxu0 0
        %883 = vmatprep.subr.bf16.mxu0 0
        %884 = vmatpush1.bf16.msra.mxu0 0
        %885 = vmatprep.subr.bf16.mxu0 0
        %886 = vmatpush1.bf16.msra.mxu0 0
        %887 = vmatprep.mubr.bf16.mxu0 0
        %888 = vmatmul.mubr.bf16.gmra.mrb[0].mxu0 %v850
        %v889 = vpop.f32.mrb[0].mxu0
        %v890 = vadd.f32 0.0, %v889
        %v891 = vpop.f32.mrb[0].mxu0
        %v892 = vpop.f32.mrb[0].mxu0
        %v893 = vpop.f32.mrb[0].mxu0
        %894 = vdwg.mxu0
        %896 = vrot.lane.b32.xlu0 %v890, 16
        %v897 = vpop.permute.xlu0 %896
        %v899 = vadd.f32 %v845, %v897
        %vm900 = vcmask 195712
        %901 = vst.msk [vmem:[#allocation4] sm:$0xff] %vm900, %v899
        %902 = vst.msk [vmem:[#allocation2] sm:$0xff] %vm837, %v819
        %903 = vrot.lane.b32.xlu0 %v620, 104
        %v904 = vpop.permute.xlu0 %903
        %905 = vrot.lane.b32.xlu0 %v625, 104
        %v906 = vpop.permute.xlu0 %905
        %v908 = vsel %vm489, %v904, 0
        %v911 = vsel %vm489, %v906, 0
        %913 = vmatprep.subr.bf16.mxu0 0
        %914 = vmatpush1.bf16.xpose.msra.mxu0 %v911
        %915 = vmatprep.subr.bf16.mxu0 0
        %916 = vmatpush1.bf16.xpose.msra.mxu0 0
        %917 = vmatprep.subr.bf16.mxu0 0
        %918 = vmatpush1.bf16.xpose.msra.mxu0 0
        %919 = vmatprep.subr.bf16.mxu0 0
        %920 = vmatpush1.bf16.xpose.msra.mxu0 0
        %921 = vmatprep.subr.bf16.mxu0 0
        %922 = vmatpush1.bf16.xpose.msra.mxu0 0
        %923 = vmatprep.subr.bf16.mxu0 0
        %924 = vmatpush1.bf16.xpose.msra.mxu0 0
        %925 = vmatprep.subr.bf16.mxu0 0
        %926 = vmatpush1.bf16.xpose.msra.mxu0 0
        %927 = vmatprep.subr.bf16.mxu0 0
        %928 = vmatpush1.bf16.xpose.msra.mxu0 0
        %929 = vmatprep.subr.bf16.mxu0 0
        %930 = vmatpush1.bf16.xpose.msra.mxu0 0
        %931 = vmatprep.subr.bf16.mxu0 0
        %932 = vmatpush1.bf16.xpose.msra.mxu0 0
        %933 = vmatprep.subr.bf16.mxu0 0
        %934 = vmatpush1.bf16.xpose.msra.mxu0 0
        %935 = vmatprep.subr.bf16.mxu0 0
        %936 = vmatpush1.bf16.xpose.msra.mxu0 0
        %937 = vmatprep.subr.bf16.mxu0 0
        %938 = vmatpush1.bf16.xpose.msra.mxu0 0
        %939 = vmatprep.subr.bf16.mxu0 0
        %940 = vmatpush1.bf16.xpose.msra.mxu0 0
        %941 = vmatprep.subr.bf16.mxu0 0
        %942 = vmatpush1.bf16.xpose.msra.mxu0 0
        %943 = vmatprep.subr.bf16.mxu0 0
        %944 = vmatpush1.bf16.xpose.msra.mxu0 0
        %945 = vmatprep.mubr.bf16.mxu0 0
        %946 = vmatmul.mubr.bf16.gmra.mrb[0].mxu0 %v908
        %v947 = vpop.f32.mrb[0].mxu0
        %v948 = vadd.f32 0.0, %v947
        %v949 = vpop.f32.mrb[0].mxu0
        %v950 = vpop.f32.mrb[0].mxu0
        %v951 = vpop.f32.mrb[0].mxu0
        %952 = vdwg.mxu0
        %v953 = vld [vmem:[#allocation2] sm:$0xff]
        %v954 = vsel %vm489, %v948, -inf
        %955 = vmax.xlane.f32.xlu0 %v954
        %v956 = vpop.xlane.xlu0 %955
        %v957 = vmax.f32 %v953, %v956
        %v958 = vsub.f32 %v953, %v957
        %v959 = vmul.f32 %v958, 1.442695
        %v960 = vpow.pop %v959
        %962 = vset.pattern.permute.xlu0 3
        %963 = vperm.xlu0 %962, %v957
        %v964 = vpop.permute.xlu0 %963
        %v966 = vsub.f32 %v948, %v964
        %v967 = vmul.f32 %v966, 1.442695
        %v968 = vpow.pop %v967
        %v969 = vld [vmem:[#allocation3] sm:$0xff]
        %v970 = vmul.f32 %v960, %v969
        %v971 = vsel %vm489, %v968, 0.0
        %972 = vadd.xlane.f32.xlu0 %v971
        %v973 = vpop.xlane.xlu0 %972
        %v974 = vadd.f32 %v970, %v973
        %vm975 = vcmask 31768
        %976 = vst.msk [vmem:[#allocation3] sm:$0xff] %vm975, %v974
        %v977 = vld [vmem:[#allocation4] sm:$0xff]
        %979 = vset.pattern.permute.xlu0 3
        %980 = vperm.xlu0 %979, %v960
        %v981 = vpop.permute.xlu0 %980
        %v983 = vmul.f32 %v981, %v977
        %v984 = vpack.c.bf16 %v968, %v968
        %985 = vrot.lane.b32.xlu0 %v708, 104
        %v986 = vpop.permute.xlu0 %985
        %v988 = vsel %vm489, %v984, 0
        %v991 = vsel %vm571, %v986, 0
        %993 = vmatprep.subr.bf16.mxu0 0
        %994 = vmatpush1.bf16.msra.mxu0 %v991
        %995 = vmatprep.subr.bf16.mxu0 0
        %996 = vmatpush1.bf16.msra.mxu0 0
        %997 = vmatprep.subr.bf16.mxu0 0
        %998 = vmatpush1.bf16.msra.mxu0 0
        %999 = vmatprep.subr.bf16.mxu0 0
        %1000 = vmatpush1.bf16.msra.mxu0 0
        %1001 = vmatprep.subr.bf16.mxu0 0
        %1002 = vmatpush1.bf16.msra.mxu0 0
        %1003 = vmatprep.subr.bf16.mxu0 0
        %1004 = vmatpush1.bf16.msra.mxu0 0
        %1005 = vmatprep.subr.bf16.mxu0 0
        %1006 = vmatpush1.bf16.msra.mxu0 0
        %1007 = vmatprep.subr.bf16.mxu0 0
        %1008 = vmatpush1.bf16.msra.mxu0 0
        %1009 = vmatprep.subr.bf16.mxu0 0
        %1010 = vmatpush1.bf16.msra.mxu0 0
        %1011 = vmatprep.subr.bf16.mxu0 0
        %1012 = vmatpush1.bf16.msra.mxu0 0
        %1013 = vmatprep.subr.bf16.mxu0 0
        %1014 = vmatpush1.bf16.msra.mxu0 0
        %1015 = vmatprep.subr.bf16.mxu0 0
        %1016 = vmatpush1.bf16.msra.mxu0 0
        %1017 = vmatprep.subr.bf16.mxu0 0
        %1018 = vmatpush1.bf16.msra.mxu0 0
        %1019 = vmatprep.subr.bf16.mxu0 0
        %1020 = vmatpush1.bf16.msra.mxu0 0
        %1021 = vmatprep.subr.bf16.mxu0 0
        %1022 = vmatpush1.bf16.msra.mxu0 0
        %1023 = vmatprep.subr.bf16.mxu0 0
        %1024 = vmatpush1.bf16.msra.mxu0 0
        %1025 = vmatprep.mubr.bf16.mxu0 0
        %1026 = vmatmul.mubr.bf16.gmra.mrb[0].mxu0 %v988
        %v1027 = vpop.f32.mrb[0].mxu0
        %v1028 = vadd.f32 0.0, %v1027
        %v1029 = vpop.f32.mrb[0].mxu0
        %v1030 = vpop.f32.mrb[0].mxu0
        %v1031 = vpop.f32.mrb[0].mxu0
        %1032 = vdwg.mxu0
        %1034 = vrot.lane.b32.xlu0 %v1028, 24
        %v1035 = vpop.permute.xlu0 %1034
        %v1037 = vadd.f32 %v983, %v1035
        %vm1038 = vcmask 261312
        %1039 = vst.msk [vmem:[#allocation4] sm:$0xff] %vm1038, %v1037
        %1040 = vst.msk [vmem:[#allocation2] sm:$0xff] %vm975, %v957
        // Predicated region
        $region77: #{tpu_custom_call.1} parent=51 // pred_check
          %p1041 = pneg %p477
        $region78: #{tpu_custom_call.1} parent=51 // pred_check_branch
          %1043 = sbr.rel (%p1041) target = $region80
        $region79: #{tpu_custom_call.1} parent=51 // pred_region
          %v1044 = vld [vmem:[#allocation4] sm:$0xff]
          %v1045 = vld [vmem:[#allocation3] sm:$0xff]
          %v1046 = vrcp.pop %v1045
          %1048 = vset.pattern.permute.xlu0 0
          %1049 = vperm.xlu0 %1048, %v1046
          %v1050 = vpop.permute.xlu0 %1049
          %v1052 = vmul.f32 %v1044, %v1050
          %1053 = vst.msk [vmem:[#allocation4] sm:$0xff] %vm489, %v1052
          %v1054 = vld [vmem:[#allocation4] sm:$0xff]
          %v1055 = vld [vmem:[#allocation3] sm:$0xff]
          %v1056 = vrcp.pop %v1055
          %1058 = vset.pattern.permute.xlu0 1
          %1059 = vperm.xlu0 %1058, %v1056
          %v1060 = vpop.permute.xlu0 %1059
          %v1062 = vmul.f32 %v1054, %v1060
          %1063 = vst.msk [vmem:[#allocation4] sm:$0xff] %vm762, %v1062
          %v1064 = vld [vmem:[#allocation4] sm:$0xff]
          %v1065 = vld [vmem:[#allocation3] sm:$0xff]
          %v1066 = vrcp.pop %v1065
          %1068 = vset.pattern.permute.xlu0 2
          %1069 = vperm.xlu0 %1068, %v1066
          %v1070 = vpop.permute.xlu0 %1069
          %v1072 = vmul.f32 %v1064, %v1070
          %1073 = vst.msk [vmem:[#allocation4] sm:$0xff] %vm900, %v1072
          %v1074 = vld [vmem:[#allocation4] sm:$0xff]
          %v1075 = vld [vmem:[#allocation3] sm:$0xff]
          %v1076 = vrcp.pop %v1075
          %1078 = vset.pattern.permute.xlu0 3
          %1079 = vperm.xlu0 %1078, %v1076
          %v1080 = vpop.permute.xlu0 %1079
          %v1082 = vmul.f32 %v1074, %v1080
          %1083 = vst.msk [vmem:[#allocation4] sm:$0xff] %vm1038, %v1082
          %v1084 = vld [vmem:[#allocation4] sm:$0xff]
          %v1085 = vpack.c.bf16 %v1084, %v1084
          %v1086 = vld [vmem:[%s424] sm:$0xff]
          %v1087 = vld [vmem:[%s5] sm:$0x1]
          %v1089 = vlaneseq
          %v1090 = vshrl.u32 %v1089, 7
          %v1091 = vsub.s32 0, %v1090
          %v1092 = vrot.slane %v1087, %v1091
          %v1094 = vadd.f32 %v1086, %v1092
          %v1095 = vld [vmem:[#allocation13] sm:$0xf]
          %v1096 = vld [vmem:[#allocation13 + $0x4] sm:$0xf]
          %v1097 = vld [vmem:[#allocation13 + $0x8] sm:$0xf]
          %v1098 = vld [vmem:[#allocation13 + $0xc] sm:$0xf]
          %v1103 = vunpack.c.l.b16 %v1095
          %v1104 = vunpack.c.l.b16 %v1096
          %v1105 = vunpack.c.l.b16 %v1097
          %v1106 = vunpack.c.l.b16 %v1098
          %v1107 = vpack.c.b16 %v1104, %v1103
          %v1108 = vpack.c.b16 %v1106, %v1105
          %vm1111 = vcmask 261120
          %v1113 = vsel %vm1111, %v1085, 0
          %1115 = vmatprep.subr.bf16.mxu0 0
          %1116 = vmatpush1.bf16.msra.mxu0 %v1107
          %1117 = vmatprep.subr.bf16.mxu0 0
          %1118 = vmatpush1.bf16.msra.mxu0 %v1108
          %1119 = vmatprep.subr.bf16.mxu0 0
          %1120 = vmatpush1.bf16.msra.mxu0 0
          %1121 = vmatprep.subr.bf16.mxu0 0
          %1122 = vmatpush1.bf16.msra.mxu0 0
          %1123 = vmatprep.subr.bf16.mxu0 0
          %1124 = vmatpush1.bf16.msra.mxu0 0
          %1125 = vmatprep.subr.bf16.mxu0 0
          %1126 = vmatpush1.bf16.msra.mxu0 0
          %1127 = vmatprep.subr.bf16.mxu0 0
          %1128 = vmatpush1.bf16.msra.mxu0 0
          %1129 = vmatprep.subr.bf16.mxu0 0
          %1130 = vmatpush1.bf16.msra.mxu0 0
          %1131 = vmatprep.subr.bf16.mxu0 0
          %1132 = vmatpush1.bf16.msra.mxu0 0
          %1133 = vmatprep.subr.bf16.mxu0 0
          %1134 = vmatpush1.bf16.msra.mxu0 0
          %1135 = vmatprep.subr.bf16.mxu0 0
          %1136 = vmatpush1.bf16.msra.mxu0 0
          %1137 = vmatprep.subr.bf16.mxu0 0
          %1138 = vmatpush1.bf16.msra.mxu0 0
          %1139 = vmatprep.subr.bf16.mxu0 0
          %1140 = vmatpush1.bf16.msra.mxu0 0
          %1141 = vmatprep.subr.bf16.mxu0 0
          %1142 = vmatpush1.bf16.msra.mxu0 0
          %1143 = vmatprep.subr.bf16.mxu0 0
          %1144 = vmatpush1.bf16.msra.mxu0 0
          %1145 = vmatprep.subr.bf16.mxu0 0
          %1146 = vmatpush1.bf16.msra.mxu0 0
          %1147 = vmatprep.mubr.bf16.mxu0 0
          %1148 = vmatmul.mubr.bf16.gmra.mrb[0].mxu0 %v1113
          %v1149 = vpop.f32.mrb[0].mxu0
          %v1150 = vadd.f32 0.0, %v1149
          %v1151 = vpop.f32.mrb[0].mxu0
          %v1152 = vpop.f32.mrb[0].mxu0
          %v1153 = vpop.f32.mrb[0].mxu0
          %1154 = vdwg.mxu0
          %v1155 = vadd.f32 %v1094, %v1150
          %v1156 = vsel %vm1111, %v1155, 0.0
          %1157 = vadd.xlane.f32.xlu0 %v1156
          %v1158 = vpop.xlane.xlu0 %1157
          %v1159 = vrcp.pop 32.0
          %v1160 = vmul.f32 %v1158, %v1159
          %v1161 = vsub.f32 %v1155, %v1160
          %v1162 = vmul.f32 %v1161, %v1161
          %v1163 = vsel %vm1111, %v1162, 0.0
          %1164 = vadd.xlane.f32.xlu0 %v1163
          %v1165 = vpop.xlane.xlu0 %1164
          %v1166 = vmul.f32 %v1165, %v1159
          %v1167 = vadd.f32 %v1166, 1e-05
          %v1168 = vrsqrt.pop %v1167
          %v1169 = vmul.f32 %v1161, %v1168
          %v1170 = vld [vmem:[%s6] sm:$0x1]
          %v1172 = vlaneseq
          %v1173 = vshrl.u32 %v1172, 7
          %v1174 = vsub.s32 0, %v1173
          %v1175 = vrot.slane %v1170, %v1174
          %v1177 = vmul.f32 %v1169, %v1175
          %v1178 = vld [vmem:[%s7] sm:$0x1]
          %v1180 = vlaneseq
          %v1181 = vshrl.u32 %v1180, 7
          %v1182 = vsub.s32 0, %v1181
          %v1183 = vrot.slane %v1178, %v1182
          %v1185 = vadd.f32 %v1177, %v1183
          %1186 = vst.msk [vmem:[%s475] sm:$0xff] %vm1111, %v1185
        $region80: #{tpu_custom_call.1} parent=51 // pred_fallthru
          _
        %s1187 = sand.u32 %s256, 1
        %s1188 = scalar_lea.sflag [#allocation7], %s1187
        %s1189 = sand.u32 %s256, 1
        %s1190 = smul.addr %s1189, 8
        %s1191 = scalar_lea.vmem [#allocation14], %s1190
        // Predicated region
        $region81: #{tpu_custom_call.1} parent=51 // pred_check
          %p1192 = pneg %p266
        $region82: #{tpu_custom_call.1} parent=51 // pred_check_branch
          %1194 = sbr.rel (%p1192) target = $region84
        $region83: #{tpu_custom_call.1} parent=51 // pred_region
          %s1196 = ssub.s32 128, 128
          %1197 = vsyncadd %s1188, %s1196
          %s1198 = sadd.s32 %s37, %s36
          %s1199 = smul.addr %s1198, 128
          %s1200 = scalar_lea.hbm %s8, %s1199
          %s1202 = sshll.u32 %s1191, 4
          %s1203 = int_to_ptr.vmem [resolvable:$true] %s1202
          %1205 = dma.vmem_to_hbm [thread:$0]  %s1203, 128, %s1200, %s1188
        $region84: #{tpu_custom_call.1} parent=51 // pred_fallthru
          _
      $region52: #{tpu_custom_call.1} parent=5 // pred_fallthru
        _
      %p1206 = scmp.le.s32.totalorder 2, %s26
      // Predicated region
      $region85: #{tpu_custom_call.1} parent=5 // pred_check
        %p1207 = pneg %p1206
      $region86: #{tpu_custom_call.1} parent=5 // pred_check_branch
        %1209 = sbr.rel (%p1207) target = $region88
      $region87: #{tpu_custom_call.1} parent=5 // pred_region
        %s1210 = ssub.s32 %s26, 2
        // Predicated region
        $region89: #{tpu_custom_call.1} parent=87 // pred_check
          %p1211 = pneg %p272
        $region90: #{tpu_custom_call.1} parent=87 // pred_check_branch
          %1213 = sbr.rel (%p1211) target = $region92
        $region91: #{tpu_custom_call.1} parent=87 // pred_region
          %s1214 = sand.u32 %s257, 1
          %s1215 = scalar_lea.sflag [#allocation7], %s1214
          %s1216 = sand.u32 %s257, 1
          %s1217 = smul.addr %s1216, 8
          %s1218 = scalar_lea.vmem [#allocation14], %s1217
          %1219 = dma.done %s1215, 128
        $region92: #{tpu_custom_call.1} parent=87 // pred_fallthru
          _
      $region88: #{tpu_custom_call.1} parent=5 // pred_fallthru
        _
    $region6: #{tpu_custom_call.1} parent=1 // loop_footer
      %s30 = sadd.s32 1, %s26
    $region7: #{tpu_custom_call.1} parent=1 // loop_footer_branch
      %25 = sbr.rel target = $region3
    $region8: #{tpu_custom_call.1} parent=1 // loop_exit
      _
    %1220 = vsyncpa [#allocation6], 1
    %s1221 = scalar_lea.sflag [#allocation6], 1
    %1222 = vsyncpa %s1221, 1
    %1223 = vsyncpa [#allocation9], 1
    %s1224 = scalar_lea.sflag [#allocation9], 1
    %1225 = vsyncpa %s1224, 1
    %1226 = vsyncpa [#allocation12], 1
    %s1227 = scalar_lea.sflag [#allocation12], 1
    %1228 = vsyncpa %s1227, 1
    %1229 = vsyncpa [#allocation7], 1
    %s1230 = scalar_lea.sflag [#allocation7], 1
    %1231 = vsyncpa %s1230, 1

</llo_original>
